<compile_context>
chip_gen: v7x
topology: tpu7x:2x2x1
jax: 0.10.0
libtpu: 0.0.40
codegen_flags: <defaults>
</compile_context>

<pallas_src>
import functools

import jax
import jax.numpy as jnp
from jax import lax
from jax.experimental import pallas as pl
from jax.experimental.pallas import tpu as pltpu

NEG_SLOPE = 0.01                     # torch.nn.LeakyReLU default
_VMEM_LIMIT = 32 * 1024 * 1024       # explicit scoped-VMEM limit (v5e default is 16 MiB)


def _leaky(x):
    return jnp.where(x >= 0, x, NEG_SLOPE * x)


# ----------------------------------------------------------------------------
# Kernel 1: conv1 + conv2 + conv3 over a (batch, P-tile) grid
#   fc1 branch (g1) and conv2's bias are pre-folded into gb_ref (per batch).
# ----------------------------------------------------------------------------
def point_feat_kernel(x_ref, gb_ref, w1t_ref, b1_ref, w2at_ref, w3t_ref,
                      b3_ref, o_ref):
    x = x_ref[0]                                                     # (TP, F) bf16
    # g2 = LeakyReLU(conv1(points))   -- (1 x F) conv == per-point linear
    g2 = _leaky(jnp.dot(x, w1t_ref[...],
                        preferred_element_type=jnp.float32) + b1_ref[...])   # (TP, 256)
    # f1 = LeakyReLU(conv2(cat([g2, g1])))  == g2 @ w2a^T + (g1 @ w2b^T + b2)
    f1 = _leaky(jnp.dot(g2, w2at_ref[...],
                        preferred_element_type=jnp.float32) + gb_ref[0])     # (TP, 128)
    # f2 = LeakyReLU(conv3(f1))
    f2 = _leaky(jnp.dot(f1, w3t_ref[...],
                        preferred_element_type=jnp.float32) + b3_ref[...])   # (TP, C)
    o_ref[0] = f2


def run_point_feat(x_bf16, g_bias, w1_t, b1, w2a_t, w3_t, b3, *, tile_p):
    B, P, F = x_bf16.shape
    C = w3_t.shape[1]
    grid = (B, pl.cdiv(P, tile_p))

    def const(a):
        return pl.BlockSpec(a.shape, lambda b, t: (0, 0))

    return pl.pallas_call(
        point_feat_kernel,
        out_shape=jax.ShapeDtypeStruct((B, P, C), jnp.float32),
        grid=grid,
        in_specs=[
            pl.BlockSpec((1, tile_p, F), lambda b, t: (b, t, 0)),            # points
            pl.BlockSpec((1, 1, g_bias.shape[-1]), lambda b, t: (b, 0, 0)),  # fc1 bias
            const(w1_t), const(b1), const(w2a_t), const(w3_t), const(b3),
        ],
        out_specs=pl.BlockSpec((1, tile_p, C), lambda b, t: (b, t, 0)),
        compiler_params=pltpu.CompilerParams(
            dimension_semantics=("parallel", "parallel"),
            vmem_limit_bytes=_VMEM_LIMIT),
    )(x_bf16, g_bias, w1_t, b1, w2a_t, w3_t, b3)


# ----------------------------------------------------------------------------
# Kernel 2: conv4 + conv5 + conv6 + sigmoid over a (batch, row-tile) grid
#   Each grid step handles a tile of mbox*P "rows" of the (scrambled) mask
#   features, so weights are reused across boxes within a step.
# ----------------------------------------------------------------------------
def mask_kernel(x_ref, w4t_ref, b4_ref, w5t_ref, b5_ref, w6_ref, b6_ref, o_ref):
    x = x_ref[0]                                                     # (TM, C+7)
    m1 = _leaky(jnp.dot(x, w4t_ref[...],
                        preferred_element_type=jnp.float32) + b4_ref[...])   # (TM, 64)
    m2 = _leaky(jnp.dot(m1, w5t_ref[...],
                        preferred_element_type=jnp.float32) + b5_ref[...])   # (TM, 32)
    # conv6 (32 -> 1) computed as (1,32) x (TM,32)^T so the result is a
    # lane-dense (1, TM) row.
    o = lax.dot_general(w6_ref[...], m2, (((1,), (1,)), ((), ())),
                        preferred_element_type=jnp.float32) + b6_ref[...]    # (1, TM)
    o_ref[0] = jax.nn.sigmoid(o)


def run_mask(mf_rows, w4_t, b4, w5_t, b5, w6, b6, *, tile_m):
    B, M, Cm = mf_rows.shape
    grid = (B, pl.cdiv(M, tile_m))

    def const(a):
        return pl.BlockSpec(a.shape, lambda b, t: (0, 0))

    return pl.pallas_call(
        mask_kernel,
        out_shape=jax.ShapeDtypeStruct((B, 1, M), jnp.float32),
        grid=grid,
        in_specs=[
            pl.BlockSpec((1, tile_m, Cm), lambda b, t: (b, t, 0)),
            const(w4_t), const(b4), const(w5_t), const(b5), const(w6), const(b6),
        ],
        out_specs=pl.BlockSpec((1, 1, tile_m), lambda b, t: (b, 0, t)),
        compiler_params=pltpu.CompilerParams(
            dimension_semantics=("parallel", "parallel"),
            vmem_limit_bytes=_VMEM_LIMIT),
    )(mf_rows, w4_t, b4, w5_t, b5, w6, b6)


# ----------------------------------------------------------------------------
# Full forward (tiny prep + glue in plain JAX, hot paths in the two kernels)
# ----------------------------------------------------------------------------
@functools.partial(jax.jit, static_argnames=("mbox",))
def pmask_net_forward(params, global_features, points_features,
                      predict_boxes, predict_box_scores, *, mbox):
    B, P, _ = points_features.shape

    # --- hoisted fc1 branch: g1 = LeakyReLU(fc1(global_features)) (B, 256) ---
    g1 = _leaky(jnp.dot(global_features, params["wfc"].T) + params["bfc"])
    # conv2 weight split follows torch.cat([g2, g1], dim=1): first 256 input
    # channels multiply the conv1 branch, last 256 the fc1 branch.
    w2a_t = params["w2"][:, :256].T                                   # (256, 128)
    w2b_t = params["w2"][:, 256:].T                                   # (256, 128)
    g_bias = (jnp.dot(g1, w2b_t) + params["b2"])[:, None, :]          # (B, 1, 128)

    # --- bf16 feeds for the dominant K=1024 matmul (f32 MXU accumulation) ---
    x_bf16 = points_features.astype(jnp.bfloat16)
    w1_t = params["w1"].T.astype(jnp.bfloat16)                        # (F, 256)
    w3_t = params["w3"].T                                             # (128, C)

    tile_p = P if P <= 512 else 512
    nf = run_point_feat(x_bf16, g_bias, w1_t, params["b1"], w2a_t, w3_t,
                        params["b3"], tile_p=tile_p)                  # (B, P, C)
    C = nf.shape[-1]

    # --- glue reproducing the PyTorch NCHW broadcast/concat + raw .view ---
    nf4 = jnp.broadcast_to(jnp.transpose(nf, (0, 2, 1))[:, :, None, :],
                           (B, C, mbox, P))
    boxes6 = predict_boxes.reshape(B, mbox, 6)
    bf = jnp.concatenate([boxes6, predict_box_scores[:, :, None]], axis=-1)
    bf4 = jnp.broadcast_to(jnp.transpose(bf, (0, 2, 1))[:, :, :, None],
                           (B, 7, mbox, P))
    mf = jnp.concatenate([nf4, bf4], axis=1)                          # (B, C+7, mbox, P)
    # Faithful row-major reinterpretation of the contiguous NCHW tensor,
    # matching PyTorch's `.view(-1, 1, p_num, C+7)` (scrambles channel/box/
    # point axes together).
    # TODO(synk): fusing this broadcast/concat directly into the mask kernel
    # (perf-review item) requires the *unscrambled* interpretation, i.e.
    # changing the reference module's semantics — kept faithful instead.
    mf_rows = mf.reshape(B, mbox * P, C + 7)

    M = mbox * P
    tile_m = M if M <= 1024 else 1024
    out = run_mask(mf_rows, params["w4"].T, params["b4"], params["w5"].T,
                   params["b5"], params["w6"], params["b6"],
                   tile_m=tile_m)                                     # (B, 1, M)
    return out.reshape(B, mbox, P)


# ----------------------------------------------------------------------------
# Deterministic parameter initialization (shapes from Pmask_Net.__init__)
# ----------------------------------------------------------------------------
def init_params(key, input_features=1024, output_features=128):
    ks = jax.random.split(key, 14)

    def w(k, shape):
        fan_in = shape[-1]
        return jax.random.normal(k, shape, jnp.float32) / jnp.sqrt(fan_in)

    def b(k, c):
        return jax.random.normal(k, (1, c), jnp.float32) * 0.01

    return {
        "wfc": w(ks[0], (256, input_features)), "bfc": b(ks[1], 256),   # fc1
        "w1": w(ks[2], (256, input_features)),  "b1": b(ks[3], 256),    # conv1
        "w2": w(ks[4], (128, 512)),             "b2": b(ks[5], 128),    # conv2
        "w3": w(ks[6], (output_features, 128)), "b3": b(ks[7], output_features),  # conv3
        "w4": w(ks[8], (64, output_features + 7)), "b4": b(ks[9], 64),  # conv4
        "w5": w(ks[10], (32, 64)),              "b5": b(ks[11], 32),    # conv5
        "w6": w(ks[12], (1, 32)),               "b6": b(ks[13], 1),     # conv6
    }


if __name__ == "__main__":
    B, P, F_IN, F_OUT, MBOX = 2, 16, 1024, 128, 8  # MBOX == Data_Configs.ins_max_num

    key = jax.random.PRNGKey(0)
    kp, kg, kx, kb, ks = jax.random.split(key, 5)
    params = init_params(kp, input_features=F_IN, output_features=F_OUT)

    global_features = jax.random.normal(kg, (B, F_IN), jnp.float32)
    points_features = jax.random.normal(kx, (B, P, F_IN), jnp.float32)
    predict_boxes = jax.random.normal(kb, (B, MBOX, 2, 3), jnp.float32)
    predict_box_scores = jax.nn.sigmoid(
        jax.random.normal(ks, (B, MBOX), jnp.float32))

    out = pmask_net_forward(params, global_features, points_features,
                            predict_boxes, predict_box_scores, mbox=MBOX)
    out = jax.block_until_ready(out)
    assert out.shape == (B, MBOX, P), out.shape
    assert bool(jnp.all(jnp.isfinite(out))), "non-finite output"
    print("KERNEL_OK")
</pallas_src>

<mosaic_0001>
module attributes {stable_mosaic.version = 11 : i64} {
  func.func @point_feat_kernel(%arg0: i32, %arg1: i32, %arg2: memref<1x16x1024xbf16, #tpu.memory_space<vmem>>, %arg3: memref<1x1x128xf32, #tpu.memory_space<vmem>>, %arg4: memref<1024x256xbf16, #tpu.memory_space<vmem>>, %arg5: memref<1x256xf32, #tpu.memory_space<vmem>>, %arg6: memref<256x128xf32, #tpu.memory_space<vmem>>, %arg7: memref<128x128xf32, #tpu.memory_space<vmem>>, %arg8: memref<1x128xf32, #tpu.memory_space<vmem>>, %arg9: memref<1x16x128xf32, #tpu.memory_space<vmem>>) attributes {dimension_semantics = [#tpu.dimension_semantics<parallel>, #tpu.dimension_semantics<parallel>], iteration_bounds = array<i64: 2, 1>, scalar_prefetch = 0 : i64, scratch_operands = 0 : i64, tpu.core_type = #tpu.core_type<tc>, window_params = [{transform_indices = @transform_0, window_bounds = array<i64: 1, 16, 1024>}, {transform_indices = @transform_1, window_bounds = array<i64: 1, 1, 128>}, {pipeline_mode = #tpu.pipeline_mode<synchronous>, transform_indices = @transform_2, window_bounds = array<i64: 1024, 256>}, {pipeline_mode = #tpu.pipeline_mode<synchronous>, transform_indices = @transform_3, window_bounds = array<i64: 1, 256>}, {pipeline_mode = #tpu.pipeline_mode<synchronous>, transform_indices = @transform_4, window_bounds = array<i64: 256, 128>}, {pipeline_mode = #tpu.pipeline_mode<synchronous>, transform_indices = @transform_5, window_bounds = array<i64: 128, 128>}, {pipeline_mode = #tpu.pipeline_mode<synchronous>, transform_indices = @transform_6, window_bounds = array<i64: 1, 128>}, {transform_indices = @transform_7, window_bounds = array<i64: 1, 16, 128>}]} {
    %c0 = arith.constant 0 : index
    %c0_0 = arith.constant 0 : index
    %c0_1 = arith.constant 0 : index
    %0 = vector.load %arg2[%c0, %c0_0, %c0_1] : memref<1x16x1024xbf16, #tpu.memory_space<vmem>>, vector<1x16x1024xbf16>
    %1 = vector.shape_cast %0 : vector<1x16x1024xbf16> to vector<16x1024xbf16>
    %c0_2 = arith.constant 0 : index
    %c0_3 = arith.constant 0 : index
    %2 = vector.load %arg4[%c0_2, %c0_3] : memref<1024x256xbf16, #tpu.memory_space<vmem>>, vector<1024x256xbf16>
    %cst = arith.constant dense<0.000000e+00> : vector<16x256xf32>
    %3 = tpu.matmul %1, %2, %cst {dimension_numbers = #tpu.dot_dimension_numbers<[1], [0], [0], [1], [0, 0, 1, 1], [], []>} : vector<16x1024xbf16>, vector<1024x256xbf16>, vector<16x256xf32> -> vector<16x256xf32>
    %c0_4 = arith.constant 0 : index
    %c0_5 = arith.constant 0 : index
    %4 = vector.load %arg5[%c0_4, %c0_5] : memref<1x256xf32, #tpu.memory_space<vmem>>, vector<1x256xf32>
    %5 = vector.broadcast %4 : vector<1x256xf32> to vector<16x256xf32>
    %6 = arith.addf %3, %5 : vector<16x256xf32>
    %cst_6 = arith.constant 0.000000e+00 : f32
    %7 = vector.broadcast %cst_6 : f32 to vector<16x256xf32>
    %8 = arith.cmpf oge, %6, %7 : vector<16x256xf32>
    %cst_7 = arith.constant 0.00999999977 : f32
    %9 = vector.broadcast %cst_7 : f32 to vector<16x256xf32>
    %10 = arith.mulf %9, %6 : vector<16x256xf32>
    %11 = arith.select %8, %6, %10 : vector<16x256xi1>, vector<16x256xf32>
    %c0_8 = arith.constant 0 : index
    %c0_9 = arith.constant 0 : index
    %12 = vector.load %arg6[%c0_8, %c0_9] : memref<256x128xf32, #tpu.memory_space<vmem>>, vector<256x128xf32>
    %cst_10 = arith.constant dense<0.000000e+00> : vector<16x128xf32>
    %13 = tpu.matmul %11, %12, %cst_10 {dimension_numbers = #tpu.dot_dimension_numbers<[1], [0], [0], [1], [0, 0, 1, 1], [], []>} : vector<16x256xf32>, vector<256x128xf32>, vector<16x128xf32> -> vector<16x128xf32>
    %c0_11 = arith.constant 0 : index
    %c0_12 = arith.constant 0 : index
    %c0_13 = arith.constant 0 : index
    %14 = vector.load %arg3[%c0_11, %c0_12, %c0_13] : memref<1x1x128xf32, #tpu.memory_space<vmem>>, vector<1x1x128xf32>
    %15 = vector.shape_cast %14 : vector<1x1x128xf32> to vector<1x128xf32>
    %16 = vector.broadcast %15 : vector<1x128xf32> to vector<16x128xf32>
    %17 = arith.addf %13, %16 : vector<16x128xf32>
    %cst_14 = arith.constant 0.000000e+00 : f32
    %18 = vector.broadcast %cst_14 : f32 to vector<16x128xf32>
    %19 = arith.cmpf oge, %17, %18 : vector<16x128xf32>
    %cst_15 = arith.constant 0.00999999977 : f32
    %20 = vector.broadcast %cst_15 : f32 to vector<16x128xf32>
    %21 = arith.mulf %20, %17 : vector<16x128xf32>
    %22 = arith.select %19, %17, %21 : vector<16x128xi1>, vector<16x128xf32>
    %c0_16 = arith.constant 0 : index
    %c0_17 = arith.constant 0 : index
    %23 = vector.load %arg7[%c0_16, %c0_17] : memref<128x128xf32, #tpu.memory_space<vmem>>, vector<128x128xf32>
    %cst_18 = arith.constant dense<0.000000e+00> : vector<16x128xf32>
    %24 = tpu.matmul %22, %23, %cst_18 {dimension_numbers = #tpu.dot_dimension_numbers<[1], [0], [0], [1], [0, 0, 1, 1], [], []>} : vector<16x128xf32>, vector<128x128xf32>, vector<16x128xf32> -> vector<16x128xf32>
    %c0_19 = arith.constant 0 : index
    %c0_20 = arith.constant 0 : index
    %25 = vector.load %arg8[%c0_19, %c0_20] : memref<1x128xf32, #tpu.memory_space<vmem>>, vector<1x128xf32>
    %26 = vector.broadcast %25 : vector<1x128xf32> to vector<16x128xf32>
    %27 = arith.addf %24, %26 : vector<16x128xf32>
    %cst_21 = arith.constant 0.000000e+00 : f32
    %28 = vector.broadcast %cst_21 : f32 to vector<16x128xf32>
    %29 = arith.cmpf oge, %27, %28 : vector<16x128xf32>
    %cst_22 = arith.constant 0.00999999977 : f32
    %30 = vector.broadcast %cst_22 : f32 to vector<16x128xf32>
    %31 = arith.mulf %30, %27 : vector<16x128xf32>
    %32 = arith.select %29, %27, %31 : vector<16x128xi1>, vector<16x128xf32>
    %c0_23 = arith.constant 0 : index
    %c0_24 = arith.constant 0 : index
    %c0_25 = arith.constant 0 : index
    %33 = vector.load %arg9[%c0_23, %c0_24, %c0_25] : memref<1x16x128xf32, #tpu.memory_space<vmem>>, vector<1x16x128xf32>
    %34 = vector.shape_cast %33 : vector<1x16x128xf32> to vector<16x128xf32>
    %35 = vector.shape_cast %32 : vector<16x128xf32> to vector<1x16x128xf32>
    tpu.vector_store %arg9[%c0_23, %c0_24, %c0_25], %35 {strides = array<i32>} : memref<1x16x128xf32, #tpu.memory_space<vmem>>, vector<1x16x128xf32>,
    return
  }
  func.func @transform_0(%arg0: i32, %arg1: i32) -> (i32, i32, i32) {
    %c0_i32 = arith.constant 0 : i32
    %c0_i32_0 = arith.constant 0 : i32
    return %arg0, %arg1, %c0_i32 : i32, i32, i32
  }
  func.func @transform_1(%arg0: i32, %arg1: i32) -> (i32, i32, i32) {
    %c0_i32 = arith.constant 0 : i32
    %c0_i32_0 = arith.constant 0 : i32
    %c0_i32_1 = arith.constant 0 : i32
    return %arg0, %c0_i32, %c0_i32_0 : i32, i32, i32
  }
  func.func @transform_2(%arg0: i32, %arg1: i32) -> (i32, i32) {
    %c0_i32 = arith.constant 0 : i32
    %c0_i32_0 = arith.constant 0 : i32
    %c0_i32_1 = arith.constant 0 : i32
    return %c0_i32, %c0_i32_0 : i32, i32
  }
  func.func @transform_3(%arg0: i32, %arg1: i32) -> (i32, i32) {
    %c0_i32 = arith.constant 0 : i32
    %c0_i32_0 = arith.constant 0 : i32
    %c0_i32_1 = arith.constant 0 : i32
    return %c0_i32, %c0_i32_0 : i32, i32
  }
  func.func @transform_4(%arg0: i32, %arg1: i32) -> (i32, i32) {
    %c0_i32 = arith.constant 0 : i32
    %c0_i32_0 = arith.constant 0 : i32
    %c0_i32_1 = arith.constant 0 : i32
    return %c0_i32, %c0_i32_0 : i32, i32
  }
  func.func @transform_5(%arg0: i32, %arg1: i32) -> (i32, i32) {
    %c0_i32 = arith.constant 0 : i32
    %c0_i32_0 = arith.constant 0 : i32
    %c0_i32_1 = arith.constant 0 : i32
    return %c0_i32, %c0_i32_0 : i32, i32
  }
  func.func @transform_6(%arg0: i32, %arg1: i32) -> (i32, i32) {
    %c0_i32 = arith.constant 0 : i32
    %c0_i32_0 = arith.constant 0 : i32
    %c0_i32_1 = arith.constant 0 : i32
    return %c0_i32, %c0_i32_0 : i32, i32
  }
  func.func @transform_7(%arg0: i32, %arg1: i32) -> (i32, i32, i32) {
    %c0_i32 = arith.constant 0 : i32
    %c0_i32_0 = arith.constant 0 : i32
    return %arg0, %arg1, %c0_i32 : i32, i32, i32
  }
}

module attributes {stable_mosaic.version = 11 : i64} {
  func.func @mask_kernel(%arg0: i32, %arg1: i32, %arg2: memref<1x128x135xf32, #tpu.memory_space<vmem>>, %arg3: memref<135x64xf32, #tpu.memory_space<vmem>>, %arg4: memref<1x64xf32, #tpu.memory_space<vmem>>, %arg5: memref<64x32xf32, #tpu.memory_space<vmem>>, %arg6: memref<1x32xf32, #tpu.memory_space<vmem>>, %arg7: memref<1x32xf32, #tpu.memory_space<vmem>>, %arg8: memref<1x1xf32, #tpu.memory_space<vmem>>, %arg9: memref<1x1x128xf32, #tpu.memory_space<vmem>>) attributes {dimension_semantics = [#tpu.dimension_semantics<parallel>, #tpu.dimension_semantics<parallel>], iteration_bounds = array<i64: 2, 1>, scalar_prefetch = 0 : i64, scratch_operands = 0 : i64, tpu.core_type = #tpu.core_type<tc>, window_params = [{transform_indices = @transform_0, window_bounds = array<i64: 1, 128, 135>}, {pipeline_mode = #tpu.pipeline_mode<synchronous>, transform_indices = @transform_1, window_bounds = array<i64: 135, 64>}, {pipeline_mode = #tpu.pipeline_mode<synchronous>, transform_indices = @transform_2, window_bounds = array<i64: 1, 64>}, {pipeline_mode = #tpu.pipeline_mode<synchronous>, transform_indices = @transform_3, window_bounds = array<i64: 64, 32>}, {pipeline_mode = #tpu.pipeline_mode<synchronous>, transform_indices = @transform_4, window_bounds = array<i64: 1, 32>}, {pipeline_mode = #tpu.pipeline_mode<synchronous>, transform_indices = @transform_5, window_bounds = array<i64: 1, 32>}, {pipeline_mode = #tpu.pipeline_mode<synchronous>, transform_indices = @transform_6, window_bounds = array<i64: 1, 1>}, {transform_indices = @transform_7, window_bounds = array<i64: 1, 1, 128>}]} {
    %c0 = arith.constant 0 : index
    %c0_0 = arith.constant 0 : index
    %c0_1 = arith.constant 0 : index
    %0 = vector.load %arg2[%c0, %c0_0, %c0_1] : memref<1x128x135xf32, #tpu.memory_space<vmem>>, vector<1x128x135xf32>
    %1 = vector.shape_cast %0 : vector<1x128x135xf32> to vector<128x135xf32>
    %c0_2 = arith.constant 0 : index
    %c0_3 = arith.constant 0 : index
    %2 = vector.load %arg3[%c0_2, %c0_3] : memref<135x64xf32, #tpu.memory_space<vmem>>, vector<135x64xf32>
    %cst = arith.constant dense<0.000000e+00> : vector<128x64xf32>
    %3 = tpu.matmul %1, %2, %cst {dimension_numbers = #tpu.dot_dimension_numbers<[1], [0], [0], [1], [0, 0, 1, 1], [], []>} : vector<128x135xf32>, vector<135x64xf32>, vector<128x64xf32> -> vector<128x64xf32>
    %c0_4 = arith.constant 0 : index
    %c0_5 = arith.constant 0 : index
    %4 = vector.load %arg4[%c0_4, %c0_5] : memref<1x64xf32, #tpu.memory_space<vmem>>, vector<1x64xf32>
    %5 = vector.broadcast %4 : vector<1x64xf32> to vector<128x64xf32>
    %6 = arith.addf %3, %5 : vector<128x64xf32>
    %cst_6 = arith.constant 0.000000e+00 : f32
    %7 = vector.broadcast %cst_6 : f32 to vector<128x64xf32>
    %8 = arith.cmpf oge, %6, %7 : vector<128x64xf32>
    %cst_7 = arith.constant 0.00999999977 : f32
    %9 = vector.broadcast %cst_7 : f32 to vector<128x64xf32>
    %10 = arith.mulf %9, %6 : vector<128x64xf32>
    %11 = arith.select %8, %6, %10 : vector<128x64xi1>, vector<128x64xf32>
    %c0_8 = arith.constant 0 : index
    %c0_9 = arith.constant 0 : index
    %12 = vector.load %arg5[%c0_8, %c0_9] : memref<64x32xf32, #tpu.memory_space<vmem>>, vector<64x32xf32>
    %cst_10 = arith.constant dense<0.000000e+00> : vector<128x32xf32>
    %13 = tpu.matmul %11, %12, %cst_10 {dimension_numbers = #tpu.dot_dimension_numbers<[1], [0], [0], [1], [0, 0, 1, 1], [], []>} : vector<128x64xf32>, vector<64x32xf32>, vector<128x32xf32> -> vector<128x32xf32>
    %c0_11 = arith.constant 0 : index
    %c0_12 = arith.constant 0 : index
    %14 = vector.load %arg6[%c0_11, %c0_12] : memref<1x32xf32, #tpu.memory_space<vmem>>, vector<1x32xf32>
    %15 = vector.broadcast %14 : vector<1x32xf32> to vector<128x32xf32>
    %16 = arith.addf %13, %15 : vector<128x32xf32>
    %cst_13 = arith.constant 0.000000e+00 : f32
    %17 = vector.broadcast %cst_13 : f32 to vector<128x32xf32>
    %18 = arith.cmpf oge, %16, %17 : vector<128x32xf32>
    %cst_14 = arith.constant 0.00999999977 : f32
    %19 = vector.broadcast %cst_14 : f32 to vector<128x32xf32>
    %20 = arith.mulf %19, %16 : vector<128x32xf32>
    %21 = arith.select %18, %16, %20 : vector<128x32xi1>, vector<128x32xf32>
    %c0_15 = arith.constant 0 : index
    %c0_16 = arith.constant 0 : index
    %22 = vector.load %arg7[%c0_15, %c0_16] : memref<1x32xf32, #tpu.memory_space<vmem>>, vector<1x32xf32>
    %cst_17 = arith.constant dense<0.000000e+00> : vector<1x128xf32>
    %23 = tpu.matmul %22, %21, %cst_17 {dimension_numbers = #tpu.dot_dimension_numbers<[1], [1], [0], [0], [0, 0, 1, 0], [], []>} : vector<1x32xf32>, vector<128x32xf32>, vector<1x128xf32> -> vector<1x128xf32>
    %c0_18 = arith.constant 0 : index
    %c0_19 = arith.constant 0 : index
    %24 = vector.load %arg8[%c0_18, %c0_19] : memref<1x1xf32, #tpu.memory_space<vmem>>, vector<1x1xf32>
    %25 = vector.broadcast %24 : vector<1x1xf32> to vector<1x128xf32>
    %26 = arith.addf %23, %25 : vector<1x128xf32>
    %27 = arith.negf %26 : vector<1x128xf32>
    %28 = math.exp %27 : vector<1x128xf32>
    %cst_20 = arith.constant 1.000000e+00 : f32
    %29 = vector.broadcast %cst_20 : f32 to vector<1x128xf32>
    %30 = arith.addf %29, %28 : vector<1x128xf32>
    %31 = arith.divf %29, %30 : vector<1x128xf32>
    %c0_21 = arith.constant 0 : index
    %c0_22 = arith.constant 0 : index
    %c0_23 = arith.constant 0 : index
    %32 = vector.load %arg9[%c0_21, %c0_22, %c0_23] : memref<1x1x128xf32, #tpu.memory_space<vmem>>, vector<1x1x128xf32>
    %33 = vector.shape_cast %32 : vector<1x1x128xf32> to vector<1x128xf32>
    %34 = vector.shape_cast %31 : vector<1x128xf32> to vector<1x1x128xf32>
    tpu.vector_store %arg9[%c0_21, %c0_22, %c0_23], %34 {strides = array<i32>} : memref<1x1x128xf32, #tpu.memory_space<vmem>>, vector<1x1x128xf32>,
    return
  }
  func.func @transform_0(%arg0: i32, %arg1: i32) -> (i32, i32, i32) {
    %c0_i32 = arith.constant 0 : i32
    %c0_i32_0 = arith.constant 0 : i32
    return %arg0, %arg1, %c0_i32 : i32, i32, i32
  }
  func.func @transform_1(%arg0: i32, %arg1: i32) -> (i32, i32) {
    %c0_i32 = arith.constant 0 : i32
    %c0_i32_0 = arith.constant 0 : i32
    %c0_i32_1 = arith.constant 0 : i32
    return %c0_i32, %c0_i32_0 : i32, i32
  }
  func.func @transform_2(%arg0: i32, %arg1: i32) -> (i32, i32) {
    %c0_i32 = arith.constant 0 : i32
    %c0_i32_0 = arith.constant 0 : i32
    %c0_i32_1 = arith.constant 0 : i32
    return %c0_i32, %c0_i32_0 : i32, i32
  }
  func.func @transform_3(%arg0: i32, %arg1: i32) -> (i32, i32) {
    %c0_i32 = arith.constant 0 : i32
    %c0_i32_0 = arith.constant 0 : i32
    %c0_i32_1 = arith.constant 0 : i32
    return %c0_i32, %c0_i32_0 : i32, i32
  }
  func.func @transform_4(%arg0: i32, %arg1: i32) -> (i32, i32) {
    %c0_i32 = arith.constant 0 : i32
    %c0_i32_0 = arith.constant 0 : i32
    %c0_i32_1 = arith.constant 0 : i32
    return %c0_i32, %c0_i32_0 : i32, i32
  }
  func.func @transform_5(%arg0: i32, %arg1: i32) -> (i32, i32) {
    %c0_i32 = arith.constant 0 : i32
    %c0_i32_0 = arith.constant 0 : i32
    %c0_i32_1 = arith.constant 0 : i32
    return %c0_i32, %c0_i32_0 : i32, i32
  }
  func.func @transform_6(%arg0: i32, %arg1: i32) -> (i32, i32) {
    %c0_i32 = arith.constant 0 : i32
    %c0_i32_0 = arith.constant 0 : i32
    %c0_i32_1 = arith.constant 0 : i32
    return %c0_i32, %c0_i32_0 : i32, i32
  }
  func.func @transform_7(%arg0: i32, %arg1: i32) -> (i32, i32, i32) {
    %c0_i32 = arith.constant 0 : i32
    %c0_i32_0 = arith.constant 0 : i32
    return %arg0, %c0_i32, %arg1 : i32, i32, i32
  }
}

</mosaic_0001>

<llo_original>
// kernel: pmask_net_forward.2
$region0: #{pmask_net_forward.2}
  #allocation0 [shape = 'u32[]', space=smem, size = 0x4, offset = 0x4, fixed_abs, tag = 'smem constant byte address 0x4 - core index']
  #allocation1 [shape = 'u32[144,128]{1,0:T(1,128)}', space=vmem, size = 0x12000, scoped, tag = 'internal scratch']
  %s0 = inlined_call_operand.vmem [shape: bf16[2,16,1024], index: 0, kind: input, shape index: {}]
  %s1 = inlined_call_operand.vmem [shape: f32[2,1,128], index: 1, kind: input, shape index: {}]
  %s2 = inlined_call_operand.vmem [shape: bf16[1024,256], index: 2, kind: input, shape index: {}]
  %s3 = inlined_call_operand.vmem [shape: f32[1,256], index: 3, kind: input, shape index: {}]
  %s4 = inlined_call_operand.vmem [shape: f32[256,128], index: 4, kind: input, shape index: {}]
  %s5 = inlined_call_operand.vmem [shape: f32[128,128], index: 5, kind: input, shape index: {}]
  %s6 = inlined_call_operand.vmem [shape: f32[1,128], index: 6, kind: input, shape index: {}]
  %s7 = inlined_call_operand.vmem [shape: f32[2,16,128], index: 7, kind: output, shape index: {}]
  %s8 = sld [smem:[#allocation0]]
  $region61: #{pmask_net_forward.2} parent=0
    _
  %s10 = ssub.s32 1, %s8
  %s11 = scalar_select 0, %s10, %s8
  loop: start=0, step=1, limit=4
  $region2: #{pmask_net_forward.2} parent=0 // loop_pre_header
    _
  $region3: #{pmask_net_forward.2} parent=0 // loop_header
    %s13 = sphi 0, %s17
    %p14 = scmp.ge.s32.totalorder %s13, 4
    %s20 = sphi 0, %s32
    %s21 = sphi 0, %s28
    %s22 = sphi 0, %s20
    %s23 = sphi 0, %s21
    %s24 = sphi 0, %s22
    %s25 = sphi 0, %s23
    %s37 = sphi 0, %s39
    %s40 = sphi 0, %s37
    %s41 = sphi 0, %s40
    %s57 = sphi 0, %s41
    %s63 = sphi 0, %s65
    %s66 = sphi 0, %s63
    %s67 = sphi 0, %s66
    %s83 = sphi 0, %s67
    %s87 = sphi 0, %s87
    %s89 = sphi 0, %s87
    %s90 = sphi 0, %s89
    %s104 = sphi 0, %s90
    %s108 = sphi 0, %s108
    %s110 = sphi 0, %s108
    %s111 = sphi 0, %s110
    %s125 = sphi 0, %s111
    %s129 = sphi 0, %s129
    %s131 = sphi 0, %s129
    %s132 = sphi 0, %s131
    %s146 = sphi 0, %s132
    %s150 = sphi 0, %s150
    %s152 = sphi 0, %s150
    %s153 = sphi 0, %s152
    %s167 = sphi 0, %s153
    %s171 = sphi 0, %s171
    %s173 = sphi 0, %s171
    %s174 = sphi 0, %s173
    %s188 = sphi 0, %s174
    %s196 = sphi 0, %s198
    %s199 = sphi 0, %s196
    %s200 = sphi 0, %s199
    %s216 = sphi 0, %s200
  $region4: #{pmask_net_forward.2} parent=0 // loop_header_branch
    %16 = sbr.rel (%p14) target = $region8
  $region5: #{pmask_net_forward.2} parent=0 // loop_body
    %s18 = ssub.s32 %s13, 1
    %s19 = ssub.s32 %s13, 2
    %s26 = sadd.s32 1, %s21
    %p27 = scmp.ge.s32.totalorder %s26, 1
    %s28 = scalar_select %p27, 0, %s26
    %s29 = sadd.s32 1, %s20
    %s30 = scalar_select %p27, %s29, %s20
    %p31 = scmp.ge.s32.totalorder %s30, 2
    %s32 = scalar_select %p31, 0, %s30
    %s33 = ssub.s32 %s20, %s32
    %s34 = ssub.s32 %s21, %s28
    %s35 = sor.u32 %s33, %s34
    %p36 = scmp.eq.s32.totalorder %s35, 0
    %s38 = sadd.s32 %s37, 1
    %s39 = scalar_select %p36, %s37, %s38
    %p42 = pneg %p36
    %p43 = scmp.eq.s32.totalorder %s13, 1
    %p44 = por %p42, %p43
    %p45 = scmp.ne.s32.totalorder %s37, %s40
    %p46 = scmp.eq.s32.totalorder %s13, 0
    %p47 = por %p45, %p46
    %p48 = scmp.ne.s32.totalorder %s37, %s40
    %p49 = scmp.eq.s32.totalorder %s18, 1
    %p50 = por %p48, %p49
    %p51 = scmp.ne.s32.totalorder %s40, %s41
    %p52 = scmp.eq.s32.totalorder %s18, 0
    %p53 = por %p51, %p52
    %p54 = scmp.ne.s32.totalorder %s40, %s41
    %p55 = scmp.eq.s32.totalorder %s19, 1
    %p56 = por %p54, %p55
    %p58 = scmp.ne.s32.totalorder %s41, %s57
    %p59 = scmp.eq.s32.totalorder %s19, 0
    %p60 = por %p58, %p59
    %s61 = ssub.s32 %s20, %s32
    %p62 = scmp.eq.s32.totalorder %s61, 0
    %s64 = sadd.s32 %s63, 1
    %s65 = scalar_select %p62, %s63, %s64
    %p68 = pneg %p62
    %p69 = scmp.eq.s32.totalorder %s13, 1
    %p70 = por %p68, %p69
    %p71 = scmp.ne.s32.totalorder %s63, %s66
    %p72 = scmp.eq.s32.totalorder %s13, 0
    %p73 = por %p71, %p72
    %p74 = scmp.ne.s32.totalorder %s63, %s66
    %p75 = scmp.eq.s32.totalorder %s18, 1
    %p76 = por %p74, %p75
    %p77 = scmp.ne.s32.totalorder %s66, %s67
    %p78 = scmp.eq.s32.totalorder %s18, 0
    %p79 = por %p77, %p78
    %p80 = scmp.ne.s32.totalorder %s66, %s67
    %p81 = scmp.eq.s32.totalorder %s19, 1
    %p82 = por %p80, %p81
    %p84 = scmp.ne.s32.totalorder %s67, %s83
    %p85 = scmp.eq.s32.totalorder %s19, 0
    %p86 = por %p84, %p85
    %s88 = sadd.s32 %s87, 1
    %p91 = scmp.eq.s32.totalorder %s13, 1
    %p92 = scmp.ne.s32.totalorder %s87, %s89
    %p93 = scmp.eq.s32.totalorder %s13, 0
    %p94 = por %p92, %p93
    %p95 = scmp.ne.s32.totalorder %s87, %s89
    %p96 = scmp.eq.s32.totalorder %s18, 1
    %p97 = por %p95, %p96
    %p98 = scmp.ne.s32.totalorder %s89, %s90
    %p99 = scmp.eq.s32.totalorder %s18, 0
    %p100 = por %p98, %p99
    %p101 = scmp.ne.s32.totalorder %s89, %s90
    %p102 = scmp.eq.s32.totalorder %s19, 1
    %p103 = por %p101, %p102
    %p105 = scmp.ne.s32.totalorder %s90, %s104
    %p106 = scmp.eq.s32.totalorder %s19, 0
    %p107 = por %p105, %p106
    %s109 = sadd.s32 %s108, 1
    %p112 = scmp.eq.s32.totalorder %s13, 1
    %p113 = scmp.ne.s32.totalorder %s108, %s110
    %p114 = scmp.eq.s32.totalorder %s13, 0
    %p115 = por %p113, %p114
    %p116 = scmp.ne.s32.totalorder %s108, %s110
    %p117 = scmp.eq.s32.totalorder %s18, 1
    %p118 = por %p116, %p117
    %p119 = scmp.ne.s32.totalorder %s110, %s111
    %p120 = scmp.eq.s32.totalorder %s18, 0
    %p121 = por %p119, %p120
    %p122 = scmp.ne.s32.totalorder %s110, %s111
    %p123 = scmp.eq.s32.totalorder %s19, 1
    %p124 = por %p122, %p123
    %p126 = scmp.ne.s32.totalorder %s111, %s125
    %p127 = scmp.eq.s32.totalorder %s19, 0
    %p128 = por %p126, %p127
    %s130 = sadd.s32 %s129, 1
    %p133 = scmp.eq.s32.totalorder %s13, 1
    %p134 = scmp.ne.s32.totalorder %s129, %s131
    %p135 = scmp.eq.s32.totalorder %s13, 0
    %p136 = por %p134, %p135
    %p137 = scmp.ne.s32.totalorder %s129, %s131
    %p138 = scmp.eq.s32.totalorder %s18, 1
    %p139 = por %p137, %p138
    %p140 = scmp.ne.s32.totalorder %s131, %s132
    %p141 = scmp.eq.s32.totalorder %s18, 0
    %p142 = por %p140, %p141
    %p143 = scmp.ne.s32.totalorder %s131, %s132
    %p144 = scmp.eq.s32.totalorder %s19, 1
    %p145 = por %p143, %p144
    %p147 = scmp.ne.s32.totalorder %s132, %s146
    %p148 = scmp.eq.s32.totalorder %s19, 0
    %p149 = por %p147, %p148
    %s151 = sadd.s32 %s150, 1
    %p154 = scmp.eq.s32.totalorder %s13, 1
    %p155 = scmp.ne.s32.totalorder %s150, %s152
    %p156 = scmp.eq.s32.totalorder %s13, 0
    %p157 = por %p155, %p156
    %p158 = scmp.ne.s32.totalorder %s150, %s152
    %p159 = scmp.eq.s32.totalorder %s18, 1
    %p160 = por %p158, %p159
    %p161 = scmp.ne.s32.totalorder %s152, %s153
    %p162 = scmp.eq.s32.totalorder %s18, 0
    %p163 = por %p161, %p162
    %p164 = scmp.ne.s32.totalorder %s152, %s153
    %p165 = scmp.eq.s32.totalorder %s19, 1
    %p166 = por %p164, %p165
    %p168 = scmp.ne.s32.totalorder %s153, %s167
    %p169 = scmp.eq.s32.totalorder %s19, 0
    %p170 = por %p168, %p169
    %s172 = sadd.s32 %s171, 1
    %p175 = scmp.eq.s32.totalorder %s13, 1
    %p176 = scmp.ne.s32.totalorder %s171, %s173
    %p177 = scmp.eq.s32.totalorder %s13, 0
    %p178 = por %p176, %p177
    %p179 = scmp.ne.s32.totalorder %s171, %s173
    %p180 = scmp.eq.s32.totalorder %s18, 1
    %p181 = por %p179, %p180
    %p182 = scmp.ne.s32.totalorder %s173, %s174
    %p183 = scmp.eq.s32.totalorder %s18, 0
    %p184 = por %p182, %p183
    %p185 = scmp.ne.s32.totalorder %s173, %s174
    %p186 = scmp.eq.s32.totalorder %s19, 1
    %p187 = por %p185, %p186
    %p189 = scmp.ne.s32.totalorder %s174, %s188
    %p190 = scmp.eq.s32.totalorder %s19, 0
    %p191 = por %p189, %p190
    %s192 = ssub.s32 %s20, %s32
    %s193 = ssub.s32 %s21, %s28
    %s194 = sor.u32 %s192, %s193
    %p195 = scmp.eq.s32.totalorder %s194, 0
    %s197 = sadd.s32 %s196, 1
    %s198 = scalar_select %p195, %s196, %s197
    %p201 = pneg %p195
    %p202 = scmp.eq.s32.totalorder %s13, 1
    %p203 = por %p201, %p202
    %p204 = scmp.ne.s32.totalorder %s196, %s199
    %p205 = scmp.eq.s32.totalorder %s13, 0
    %p206 = por %p204, %p205
    %p207 = scmp.ne.s32.totalorder %s196, %s199
    %p208 = scmp.eq.s32.totalorder %s18, 1
    %p209 = por %p207, %p208
    %p210 = scmp.ne.s32.totalorder %s199, %s200
    %p211 = scmp.eq.s32.totalorder %s18, 0
    %p212 = por %p210, %p211
    %p213 = scmp.ne.s32.totalorder %s199, %s200
    %p214 = scmp.eq.s32.totalorder %s19, 1
    %p215 = por %p213, %p214
    %p217 = scmp.ne.s32.totalorder %s200, %s216
    %p218 = scmp.eq.s32.totalorder %s19, 0
    %p219 = por %p217, %p218
    %p220 = scmp.le.s32.totalorder 1, %s13
    %p221 = scmp.lt.s32.totalorder %s13, 3
    %p222 = pnand %p220, %p221
    %p223 = pneg %p222
    // Predicated region
    $region9: #{pmask_net_forward.2} parent=5 // pred_check
      _
    $region10: #{pmask_net_forward.2} parent=5 // pred_check_branch
      %225 = sbr.rel (%p222) target = $region12
    $region11: #{pmask_net_forward.2} parent=5 // pred_region
      %s226 = ssub.s32 %s13, 1
      // Predicated region
      $region13: #{pmask_net_forward.2} parent=11 // pred_check
        %p227 = pneg %p100
      $region14: #{pmask_net_forward.2} parent=11 // pred_check_branch
        %229 = sbr.rel (%p227) target = $region16
      $region15: #{pmask_net_forward.2} parent=11 // pred_region
        _
      $region16: #{pmask_net_forward.2} parent=11 // pred_fallthru
        _
      // Predicated region
      $region17: #{pmask_net_forward.2} parent=11 // pred_check
        %p230 = pneg %p121
      $region18: #{pmask_net_forward.2} parent=11 // pred_check_branch
        %232 = sbr.rel (%p230) target = $region20
      $region19: #{pmask_net_forward.2} parent=11 // pred_region
        _
      $region20: #{pmask_net_forward.2} parent=11 // pred_fallthru
        _
      // Predicated region
      $region21: #{pmask_net_forward.2} parent=11 // pred_check
        %p233 = pneg %p142
      $region22: #{pmask_net_forward.2} parent=11 // pred_check_branch
        %235 = sbr.rel (%p233) target = $region24
      $region23: #{pmask_net_forward.2} parent=11 // pred_region
        _
      $region24: #{pmask_net_forward.2} parent=11 // pred_fallthru
        _
      // Predicated region
      $region25: #{pmask_net_forward.2} parent=11 // pred_check
        %p236 = pneg %p163
      $region26: #{pmask_net_forward.2} parent=11 // pred_check_branch
        %238 = sbr.rel (%p236) target = $region28
      $region27: #{pmask_net_forward.2} parent=11 // pred_region
        _
      $region28: #{pmask_net_forward.2} parent=11 // pred_fallthru
        _
      // Predicated region
      $region29: #{pmask_net_forward.2} parent=11 // pred_check
        %p239 = pneg %p184
      $region30: #{pmask_net_forward.2} parent=11 // pred_check_branch
        %241 = sbr.rel (%p239) target = $region32
      $region31: #{pmask_net_forward.2} parent=11 // pred_region
        _
      $region32: #{pmask_net_forward.2} parent=11 // pred_fallthru
        _
    $region12: #{pmask_net_forward.2} parent=5 // pred_fallthru
      _
    %p242 = scmp.lt.s32.totalorder %s13, 2
    // Predicated region
    $region33: #{pmask_net_forward.2} parent=5 // pred_check
      %p243 = pneg %p242
    $region34: #{pmask_net_forward.2} parent=5 // pred_check_branch
      %245 = sbr.rel (%p243) target = $region36
    $region35: #{pmask_net_forward.2} parent=5 // pred_region
      // Predicated region
      $region37: #{pmask_net_forward.2} parent=35 // pred_check
        %p246 = pneg %p47
      $region38: #{pmask_net_forward.2} parent=35 // pred_check_branch
        %248 = sbr.rel (%p246) target = $region40
      $region39: #{pmask_net_forward.2} parent=35 // pred_region
        %s249 = smul.u32 2, %s21
        %p250 = scmp.lt.s32.totalorder %s20, 1
        %s251 = scalar_select %p250, %s20, 1
        %p252 = scmp.lt.s32.totalorder %s249, 1
        %s253 = scalar_select %p252, %s249, 1
        %s254 = smul.addr %s253, 8
        %s255 = smul.addr %s251, 16
        %s256 = sadd.s32 %s254, %s255
        %s257 = smul.addr %s256, 4
        %s258 = scalar_lea.vmem %s0, %s257
        %s259 = smul.u32 2, %s21
      $region40: #{pmask_net_forward.2} parent=35 // pred_fallthru
        _
      // Predicated region
      $region41: #{pmask_net_forward.2} parent=35 // pred_check
        %p260 = pneg %p73
      $region42: #{pmask_net_forward.2} parent=35 // pred_check_branch
        %262 = sbr.rel (%p260) target = $region44
      $region43: #{pmask_net_forward.2} parent=35 // pred_region
        %p263 = scmp.lt.s32.totalorder %s20, 1
        %s264 = scalar_select %p263, %s20, 1
        %s265 = scalar_lea.vmem %s1, %s264
      $region44: #{pmask_net_forward.2} parent=35 // pred_fallthru
        _
    $region36: #{pmask_net_forward.2} parent=5 // pred_fallthru
      _
    %p266 = scmp.le.s32.totalorder 1, %s13
    %p267 = scmp.lt.s32.totalorder %s13, 3
    %p268 = pnand %p266, %p267
    %p269 = pneg %p268
    // Predicated region
    $region45: #{pmask_net_forward.2} parent=5 // pred_check
      _
    $region46: #{pmask_net_forward.2} parent=5 // pred_check_branch
      %271 = sbr.rel (%p268) target = $region48
    $region47: #{pmask_net_forward.2} parent=5 // pred_region
      %s272 = ssub.s32 %s13, 1
      %s273 = smul.u32 2, %s23
      %p274 = scmp.lt.s32.totalorder %s22, 1
      %s275 = scalar_select %p274, %s22, 1
      %p276 = scmp.lt.s32.totalorder %s273, 1
      %s277 = scalar_select %p276, %s273, 1
      %s278 = smul.addr %s277, 8
      %s279 = smul.addr %s275, 16
      %s280 = sadd.s32 %s278, %s279
      %s281 = smul.addr %s280, 4
      %s282 = scalar_lea.vmem %s0, %s281
      %p283 = pneg %p53
      %p284 = pneg %p50
      %p285 = scmp.lt.s32.totalorder %s22, 1
      %s286 = scalar_select %p285, %s22, 1
      %s287 = scalar_lea.vmem %s1, %s286
      %p288 = pneg %p79
      %p289 = pneg %p76
      %p290 = pneg %p100
      %p291 = pneg %p97
      %p292 = pneg %p121
      %p293 = pneg %p118
      %p294 = pneg %p142
      %p295 = pneg %p139
      %p296 = pneg %p163
      %p297 = pneg %p160
      %p298 = pneg %p184
      %p299 = pneg %p181
      %p300 = pneg %p212
      %p301 = pneg %p209
      %s302 = smul.u32 2, %s23
      %p303 = scmp.lt.s32.totalorder %s22, 1
      %s304 = scalar_select %p303, %s22, 1
      %p305 = scmp.lt.s32.totalorder %s302, 1
      %s306 = scalar_select %p305, %s302, 1
      %s307 = smul.addr %s304, 2
      %s308 = sadd.s32 %s306, %s307
      %s309 = smul.addr %s308, 8
      %s310 = scalar_lea.vmem %s7, %s309
      %s311 = smul.u32 2, %s23
      %p312 = scmp.lt.s32.totalorder %s22, 1
      %s313 = scalar_select %p312, %s22, 1
      %p314 = scmp.lt.s32.totalorder %s311, 1
      %s315 = scalar_select %p314, %s311, 1
      %s316 = smul.addr %s315, 8
      %s317 = smul.addr %s313, 16
      %s318 = sadd.s32 %s316, %s317
      %s319 = smul.addr %s318, 4
      %s320 = scalar_lea.vmem %s0, %s319
      %s321 = smul.u32 2, %s23
      %p322 = scmp.lt.s32.totalorder %s22, 1
      %s323 = scalar_select %p322, %s22, 1
      %s324 = scalar_lea.vmem %s1, %s323
      %s325 = smul.u32 2, %s23
      %p326 = scmp.lt.s32.totalorder %s22, 1
      %s327 = scalar_select %p326, %s22, 1
      %p328 = scmp.lt.s32.totalorder %s325, 1
      %s329 = scalar_select %p328, %s325, 1
      %s330 = smul.addr %s327, 2
      %s331 = sadd.s32 %s329, %s330
      %s332 = smul.addr %s331, 8
      %s333 = scalar_lea.vmem %s7, %s332
      %s334 = smul.u32 2, %s23
      %v335 = vld [vmem:[%s320] sm:$0xff]
      %v336 = vld [vmem:[%s320 + $0x8] sm:$0xff]
      %v337 = vld [vmem:[%s320 + $0x10] sm:$0xff]
      %v338 = vld [vmem:[%s320 + $0x18] sm:$0xff]
      %v339 = vld [vmem:[%s320 + $0x20] sm:$0xff]
      %v340 = vld [vmem:[%s320 + $0x28] sm:$0xff]
      %v341 = vld [vmem:[%s320 + $0x30] sm:$0xff]
      %v342 = vld [vmem:[%s320 + $0x38] sm:$0xff]
      %v343 = vld [vmem:[%s2] sm:$0xff]
      %v344 = vld [vmem:[%s2 + $0x8] sm:$0xff]
      %v345 = vld [vmem:[%s2 + $0x10] sm:$0xff]
      %v346 = vld [vmem:[%s2 + $0x18] sm:$0xff]
      %v347 = vld [vmem:[%s2 + $0x20] sm:$0xff]
      %v348 = vld [vmem:[%s2 + $0x28] sm:$0xff]
      %v349 = vld [vmem:[%s2 + $0x30] sm:$0xff]
      %v350 = vld [vmem:[%s2 + $0x38] sm:$0xff]
      %v351 = vld [vmem:[%s2 + $0x40] sm:$0xff]
      %v352 = vld [vmem:[%s2 + $0x48] sm:$0xff]
      %v353 = vld [vmem:[%s2 + $0x50] sm:$0xff]
      %v354 = vld [vmem:[%s2 + $0x58] sm:$0xff]
      %v355 = vld [vmem:[%s2 + $0x60] sm:$0xff]
      %v356 = vld [vmem:[%s2 + $0x68] sm:$0xff]
      %v357 = vld [vmem:[%s2 + $0x70] sm:$0xff]
      %v358 = vld [vmem:[%s2 + $0x78] sm:$0xff]
      %v359 = vld [vmem:[%s2 + $0x80] sm:$0xff]
      %v360 = vld [vmem:[%s2 + $0x88] sm:$0xff]
      %v361 = vld [vmem:[%s2 + $0x90] sm:$0xff]
      %v362 = vld [vmem:[%s2 + $0x98] sm:$0xff]
      %v363 = vld [vmem:[%s2 + $0xa0] sm:$0xff]
      %v364 = vld [vmem:[%s2 + $0xa8] sm:$0xff]
      %v365 = vld [vmem:[%s2 + $0xb0] sm:$0xff]
      %v366 = vld [vmem:[%s2 + $0xb8] sm:$0xff]
      %v367 = vld [vmem:[%s2 + $0xc0] sm:$0xff]
      %v368 = vld [vmem:[%s2 + $0xc8] sm:$0xff]
      %v369 = vld [vmem:[%s2 + $0xd0] sm:$0xff]
      %v370 = vld [vmem:[%s2 + $0xd8] sm:$0xff]
      %v371 = vld [vmem:[%s2 + $0xe0] sm:$0xff]
      %v372 = vld [vmem:[%s2 + $0xe8] sm:$0xff]
      %v373 = vld [vmem:[%s2 + $0xf0] sm:$0xff]
      %v374 = vld [vmem:[%s2 + $0xf8] sm:$0xff]
      %v375 = vld [vmem:[%s2 + $0x100] sm:$0xff]
      %v376 = vld [vmem:[%s2 + $0x108] sm:$0xff]
      %v377 = vld [vmem:[%s2 + $0x110] sm:$0xff]
      %v378 = vld [vmem:[%s2 + $0x118] sm:$0xff]
      %v379 = vld [vmem:[%s2 + $0x120] sm:$0xff]
      %v380 = vld [vmem:[%s2 + $0x128] sm:$0xff]
      %v381 = vld [vmem:[%s2 + $0x130] sm:$0xff]
      %v382 = vld [vmem:[%s2 + $0x138] sm:$0xff]
      %v383 = vld [vmem:[%s2 + $0x140] sm:$0xff]
      %v384 = vld [vmem:[%s2 + $0x148] sm:$0xff]
      %v385 = vld [vmem:[%s2 + $0x150] sm:$0xff]
      %v386 = vld [vmem:[%s2 + $0x158] sm:$0xff]
      %v387 = vld [vmem:[%s2 + $0x160] sm:$0xff]
      %v388 = vld [vmem:[%s2 + $0x168] sm:$0xff]
      %v389 = vld [vmem:[%s2 + $0x170] sm:$0xff]
      %v390 = vld [vmem:[%s2 + $0x178] sm:$0xff]
      %v391 = vld [vmem:[%s2 + $0x180] sm:$0xff]
      %v392 = vld [vmem:[%s2 + $0x188] sm:$0xff]
      %v393 = vld [vmem:[%s2 + $0x190] sm:$0xff]
      %v394 = vld [vmem:[%s2 + $0x198] sm:$0xff]
      %v395 = vld [vmem:[%s2 + $0x1a0] sm:$0xff]
      %v396 = vld [vmem:[%s2 + $0x1a8] sm:$0xff]
      %v397 = vld [vmem:[%s2 + $0x1b0] sm:$0xff]
      %v398 = vld [vmem:[%s2 + $0x1b8] sm:$0xff]
      %v399 = vld [vmem:[%s2 + $0x1c0] sm:$0xff]
      %v400 = vld [vmem:[%s2 + $0x1c8] sm:$0xff]
      %v401 = vld [vmem:[%s2 + $0x1d0] sm:$0xff]
      %v402 = vld [vmem:[%s2 + $0x1d8] sm:$0xff]
      %v403 = vld [vmem:[%s2 + $0x1e0] sm:$0xff]
      %v404 = vld [vmem:[%s2 + $0x1e8] sm:$0xff]
      %v405 = vld [vmem:[%s2 + $0x1f0] sm:$0xff]
      %v406 = vld [vmem:[%s2 + $0x1f8] sm:$0xff]
      %v407 = vld [vmem:[%s2 + $0x200] sm:$0xff]
      %v408 = vld [vmem:[%s2 + $0x208] sm:$0xff]
      %v409 = vld [vmem:[%s2 + $0x210] sm:$0xff]
      %v410 = vld [vmem:[%s2 + $0x218] sm:$0xff]
      %v411 = vld [vmem:[%s2 + $0x220] sm:$0xff]
      %v412 = vld [vmem:[%s2 + $0x228] sm:$0xff]
      %v413 = vld [vmem:[%s2 + $0x230] sm:$0xff]
      %v414 = vld [vmem:[%s2 + $0x238] sm:$0xff]
      %v415 = vld [vmem:[%s2 + $0x240] sm:$0xff]
      %v416 = vld [vmem:[%s2 + $0x248] sm:$0xff]
      %v417 = vld [vmem:[%s2 + $0x250] sm:$0xff]
      %v418 = vld [vmem:[%s2 + $0x258] sm:$0xff]
      %v419 = vld [vmem:[%s2 + $0x260] sm:$0xff]
      %v420 = vld [vmem:[%s2 + $0x268] sm:$0xff]
      %v421 = vld [vmem:[%s2 + $0x270] sm:$0xff]
      %v422 = vld [vmem:[%s2 + $0x278] sm:$0xff]
      %v423 = vld [vmem:[%s2 + $0x280] sm:$0xff]
      %v424 = vld [vmem:[%s2 + $0x288] sm:$0xff]
      %v425 = vld [vmem:[%s2 + $0x290] sm:$0xff]
      %v426 = vld [vmem:[%s2 + $0x298] sm:$0xff]
      %v427 = vld [vmem:[%s2 + $0x2a0] sm:$0xff]
      %v428 = vld [vmem:[%s2 + $0x2a8] sm:$0xff]
      %v429 = vld [vmem:[%s2 + $0x2b0] sm:$0xff]
      %v430 = vld [vmem:[%s2 + $0x2b8] sm:$0xff]
      %v431 = vld [vmem:[%s2 + $0x2c0] sm:$0xff]
      %v432 = vld [vmem:[%s2 + $0x2c8] sm:$0xff]
      %v433 = vld [vmem:[%s2 + $0x2d0] sm:$0xff]
      %v434 = vld [vmem:[%s2 + $0x2d8] sm:$0xff]
      %v435 = vld [vmem:[%s2 + $0x2e0] sm:$0xff]
      %v436 = vld [vmem:[%s2 + $0x2e8] sm:$0xff]
      %v437 = vld [vmem:[%s2 + $0x2f0] sm:$0xff]
      %v438 = vld [vmem:[%s2 + $0x2f8] sm:$0xff]
      %v439 = vld [vmem:[%s2 + $0x300] sm:$0xff]
      %v440 = vld [vmem:[%s2 + $0x308] sm:$0xff]
      %v441 = vld [vmem:[%s2 + $0x310] sm:$0xff]
      %v442 = vld [vmem:[%s2 + $0x318] sm:$0xff]
      %v443 = vld [vmem:[%s2 + $0x320] sm:$0xff]
      %v444 = vld [vmem:[%s2 + $0x328] sm:$0xff]
      %v445 = vld [vmem:[%s2 + $0x330] sm:$0xff]
      %v446 = vld [vmem:[%s2 + $0x338] sm:$0xff]
      %v447 = vld [vmem:[%s2 + $0x340] sm:$0xff]
      %v448 = vld [vmem:[%s2 + $0x348] sm:$0xff]
      %v449 = vld [vmem:[%s2 + $0x350] sm:$0xff]
      %v450 = vld [vmem:[%s2 + $0x358] sm:$0xff]
      %v451 = vld [vmem:[%s2 + $0x360] sm:$0xff]
      %v452 = vld [vmem:[%s2 + $0x368] sm:$0xff]
      %v453 = vld [vmem:[%s2 + $0x370] sm:$0xff]
      %v454 = vld [vmem:[%s2 + $0x378] sm:$0xff]
      %v455 = vld [vmem:[%s2 + $0x380] sm:$0xff]
      %v456 = vld [vmem:[%s2 + $0x388] sm:$0xff]
      %v457 = vld [vmem:[%s2 + $0x390] sm:$0xff]
      %v458 = vld [vmem:[%s2 + $0x398] sm:$0xff]
      %v459 = vld [vmem:[%s2 + $0x3a0] sm:$0xff]
      %v460 = vld [vmem:[%s2 + $0x3a8] sm:$0xff]
      %v461 = vld [vmem:[%s2 + $0x3b0] sm:$0xff]
      %v462 = vld [vmem:[%s2 + $0x3b8] sm:$0xff]
      %v463 = vld [vmem:[%s2 + $0x3c0] sm:$0xff]
      %v464 = vld [vmem:[%s2 + $0x3c8] sm:$0xff]
      %v465 = vld [vmem:[%s2 + $0x3d0] sm:$0xff]
      %v466 = vld [vmem:[%s2 + $0x3d8] sm:$0xff]
      %v467 = vld [vmem:[%s2 + $0x3e0] sm:$0xff]
      %v468 = vld [vmem:[%s2 + $0x3e8] sm:$0xff]
      %v469 = vld [vmem:[%s2 + $0x3f0] sm:$0xff]
      %v470 = vld [vmem:[%s2 + $0x3f8] sm:$0xff]
      %v471 = vld [vmem:[%s3] sm:$0x3]
      %v473 = vlaneseq
      %v474 = vshrl.u32 %v473, 7
      %v475 = vsub.s32 0, %v474
      %v476 = vrot.slane %v471, %v475
      %v477 = vlaneseq
      %v478 = vshrl.u32 %v477, 7
      %v479 = vsub.s32 1, %v478
      %v480 = vrot.slane %v471, %v479
      %v491 = vunpack.c.l.b16 %v335
      %v492 = vunpack.c.h.b16 %v335
      %v493 = vunpack.c.l.b16 %v336
      %v494 = vunpack.c.h.b16 %v336
      %v495 = vunpack.c.l.b16 %v337
      %v496 = vunpack.c.h.b16 %v337
      %v497 = vunpack.c.l.b16 %v338
      %v498 = vunpack.c.h.b16 %v338
      %v499 = vunpack.c.l.b16 %v339
      %v500 = vunpack.c.h.b16 %v339
      %v501 = vunpack.c.l.b16 %v340
      %v502 = vunpack.c.h.b16 %v340
      %v503 = vunpack.c.l.b16 %v341
      %v504 = vunpack.c.h.b16 %v341
      %v505 = vunpack.c.l.b16 %v342
      %v506 = vunpack.c.h.b16 %v342
      %v507 = vpack.c.b16 %v499, %v491
      %v508 = vpack.c.b16 %v500, %v492
      %v509 = vpack.c.b16 %v501, %v493
      %v510 = vpack.c.b16 %v502, %v494
      %v511 = vpack.c.b16 %v503, %v495
      %v512 = vpack.c.b16 %v504, %v496
      %v513 = vpack.c.b16 %v505, %v497
      %v514 = vpack.c.b16 %v506, %v498
      %v651 = vunpack.c.l.b16 %v343
      %v652 = vunpack.c.h.b16 %v343
      %v653 = vunpack.c.l.b16 %v344
      %v654 = vunpack.c.h.b16 %v344
      %v655 = vunpack.c.l.b16 %v345
      %v656 = vunpack.c.h.b16 %v345
      %v657 = vunpack.c.l.b16 %v346
      %v658 = vunpack.c.h.b16 %v346
      %v659 = vunpack.c.l.b16 %v347
      %v660 = vunpack.c.h.b16 %v347
      %v661 = vunpack.c.l.b16 %v348
      %v662 = vunpack.c.h.b16 %v348
      %v663 = vunpack.c.l.b16 %v349
      %v664 = vunpack.c.h.b16 %v349
      %v665 = vunpack.c.l.b16 %v350
      %v666 = vunpack.c.h.b16 %v350
      %v667 = vunpack.c.l.b16 %v351
      %v668 = vunpack.c.h.b16 %v351
      %v669 = vunpack.c.l.b16 %v352
      %v670 = vunpack.c.h.b16 %v352
      %v671 = vunpack.c.l.b16 %v353
      %v672 = vunpack.c.h.b16 %v353
      %v673 = vunpack.c.l.b16 %v354
      %v674 = vunpack.c.h.b16 %v354
      %v675 = vunpack.c.l.b16 %v355
      %v676 = vunpack.c.h.b16 %v355
      %v677 = vunpack.c.l.b16 %v356
      %v678 = vunpack.c.h.b16 %v356
      %v679 = vunpack.c.l.b16 %v357
      %v680 = vunpack.c.h.b16 %v357
      %v681 = vunpack.c.l.b16 %v358
      %v682 = vunpack.c.h.b16 %v358
      %v683 = vunpack.c.l.b16 %v359
      %v684 = vunpack.c.h.b16 %v359
      %v685 = vunpack.c.l.b16 %v360
      %v686 = vunpack.c.h.b16 %v360
      %v687 = vunpack.c.l.b16 %v361
      %v688 = vunpack.c.h.b16 %v361
      %v689 = vunpack.c.l.b16 %v362
      %v690 = vunpack.c.h.b16 %v362
      %v691 = vunpack.c.l.b16 %v363
      %v692 = vunpack.c.h.b16 %v363
      %v693 = vunpack.c.l.b16 %v364
      %v694 = vunpack.c.h.b16 %v364
      %v695 = vunpack.c.l.b16 %v365
      %v696 = vunpack.c.h.b16 %v365
      %v697 = vunpack.c.l.b16 %v366
      %v698 = vunpack.c.h.b16 %v366
      %v699 = vunpack.c.l.b16 %v367
      %v700 = vunpack.c.h.b16 %v367
      %v701 = vunpack.c.l.b16 %v368
      %v702 = vunpack.c.h.b16 %v368
      %v703 = vunpack.c.l.b16 %v369
      %v704 = vunpack.c.h.b16 %v369
      %v705 = vunpack.c.l.b16 %v370
      %v706 = vunpack.c.h.b16 %v370
      %v707 = vunpack.c.l.b16 %v371
      %v708 = vunpack.c.h.b16 %v371
      %v709 = vunpack.c.l.b16 %v372
      %v710 = vunpack.c.h.b16 %v372
      %v711 = vunpack.c.l.b16 %v373
      %v712 = vunpack.c.h.b16 %v373
      %v713 = vunpack.c.l.b16 %v374
      %v714 = vunpack.c.h.b16 %v374
      %v715 = vunpack.c.l.b16 %v375
      %v716 = vunpack.c.h.b16 %v375
      %v717 = vunpack.c.l.b16 %v376
      %v718 = vunpack.c.h.b16 %v376
      %v719 = vunpack.c.l.b16 %v377
      %v720 = vunpack.c.h.b16 %v377
      %v721 = vunpack.c.l.b16 %v378
      %v722 = vunpack.c.h.b16 %v378
      %v723 = vunpack.c.l.b16 %v379
      %v724 = vunpack.c.h.b16 %v379
      %v725 = vunpack.c.l.b16 %v380
      %v726 = vunpack.c.h.b16 %v380
      %v727 = vunpack.c.l.b16 %v381
      %v728 = vunpack.c.h.b16 %v381
      %v729 = vunpack.c.l.b16 %v382
      %v730 = vunpack.c.h.b16 %v382
      %v731 = vunpack.c.l.b16 %v383
      %v732 = vunpack.c.h.b16 %v383
      %v733 = vunpack.c.l.b16 %v384
      %v734 = vunpack.c.h.b16 %v384
      %v735 = vunpack.c.l.b16 %v385
      %v736 = vunpack.c.h.b16 %v385
      %v737 = vunpack.c.l.b16 %v386
      %v738 = vunpack.c.h.b16 %v386
      %v739 = vunpack.c.l.b16 %v387
      %v740 = vunpack.c.h.b16 %v387
      %v741 = vunpack.c.l.b16 %v388
      %v742 = vunpack.c.h.b16 %v388
      %v743 = vunpack.c.l.b16 %v389
      %v744 = vunpack.c.h.b16 %v389
      %v745 = vunpack.c.l.b16 %v390
      %v746 = vunpack.c.h.b16 %v390
      %v747 = vunpack.c.l.b16 %v391
      %v748 = vunpack.c.h.b16 %v391
      %v749 = vunpack.c.l.b16 %v392
      %v750 = vunpack.c.h.b16 %v392
      %v751 = vunpack.c.l.b16 %v393
      %v752 = vunpack.c.h.b16 %v393
      %v753 = vunpack.c.l.b16 %v394
      %v754 = vunpack.c.h.b16 %v394
      %v755 = vunpack.c.l.b16 %v395
      %v756 = vunpack.c.h.b16 %v395
      %v757 = vunpack.c.l.b16 %v396
      %v758 = vunpack.c.h.b16 %v396
      %v759 = vunpack.c.l.b16 %v397
      %v760 = vunpack.c.h.b16 %v397
      %v761 = vunpack.c.l.b16 %v398
      %v762 = vunpack.c.h.b16 %v398
      %v763 = vunpack.c.l.b16 %v399
      %v764 = vunpack.c.h.b16 %v399
      %v765 = vunpack.c.l.b16 %v400
      %v766 = vunpack.c.h.b16 %v400
      %v767 = vunpack.c.l.b16 %v401
      %v768 = vunpack.c.h.b16 %v401
      %v769 = vunpack.c.l.b16 %v402
      %v770 = vunpack.c.h.b16 %v402
      %v771 = vunpack.c.l.b16 %v403
      %v772 = vunpack.c.h.b16 %v403
      %v773 = vunpack.c.l.b16 %v404
      %v774 = vunpack.c.h.b16 %v404
      %v775 = vunpack.c.l.b16 %v405
      %v776 = vunpack.c.h.b16 %v405
      %v777 = vunpack.c.l.b16 %v406
      %v778 = vunpack.c.h.b16 %v406
      %v779 = vunpack.c.l.b16 %v407
      %v780 = vunpack.c.h.b16 %v407
      %v781 = vunpack.c.l.b16 %v408
      %v782 = vunpack.c.h.b16 %v408
      %v783 = vunpack.c.l.b16 %v409
      %v784 = vunpack.c.h.b16 %v409
      %v785 = vunpack.c.l.b16 %v410
      %v786 = vunpack.c.h.b16 %v410
      %v787 = vunpack.c.l.b16 %v411
      %v788 = vunpack.c.h.b16 %v411
      %v789 = vunpack.c.l.b16 %v412
      %v790 = vunpack.c.h.b16 %v412
      %v791 = vunpack.c.l.b16 %v413
      %v792 = vunpack.c.h.b16 %v413
      %v793 = vunpack.c.l.b16 %v414
      %v794 = vunpack.c.h.b16 %v414
      %v795 = vunpack.c.l.b16 %v415
      %v796 = vunpack.c.h.b16 %v415
      %v797 = vunpack.c.l.b16 %v416
      %v798 = vunpack.c.h.b16 %v416
      %v799 = vunpack.c.l.b16 %v417
      %v800 = vunpack.c.h.b16 %v417
      %v801 = vunpack.c.l.b16 %v418
      %v802 = vunpack.c.h.b16 %v418
      %v803 = vunpack.c.l.b16 %v419
      %v804 = vunpack.c.h.b16 %v419
      %v805 = vunpack.c.l.b16 %v420
      %v806 = vunpack.c.h.b16 %v420
      %v807 = vunpack.c.l.b16 %v421
      %v808 = vunpack.c.h.b16 %v421
      %v809 = vunpack.c.l.b16 %v422
      %v810 = vunpack.c.h.b16 %v422
      %v811 = vunpack.c.l.b16 %v423
      %v812 = vunpack.c.h.b16 %v423
      %v813 = vunpack.c.l.b16 %v424
      %v814 = vunpack.c.h.b16 %v424
      %v815 = vunpack.c.l.b16 %v425
      %v816 = vunpack.c.h.b16 %v425
      %v817 = vunpack.c.l.b16 %v426
      %v818 = vunpack.c.h.b16 %v426
      %v819 = vunpack.c.l.b16 %v427
      %v820 = vunpack.c.h.b16 %v427
      %v821 = vunpack.c.l.b16 %v428
      %v822 = vunpack.c.h.b16 %v428
      %v823 = vunpack.c.l.b16 %v429
      %v824 = vunpack.c.h.b16 %v429
      %v825 = vunpack.c.l.b16 %v430
      %v826 = vunpack.c.h.b16 %v430
      %v827 = vunpack.c.l.b16 %v431
      %v828 = vunpack.c.h.b16 %v431
      %v829 = vunpack.c.l.b16 %v432
      %v830 = vunpack.c.h.b16 %v432
      %v831 = vunpack.c.l.b16 %v433
      %v832 = vunpack.c.h.b16 %v433
      %v833 = vunpack.c.l.b16 %v434
      %v834 = vunpack.c.h.b16 %v434
      %v835 = vunpack.c.l.b16 %v435
      %v836 = vunpack.c.h.b16 %v435
      %v837 = vunpack.c.l.b16 %v436
      %v838 = vunpack.c.h.b16 %v436
      %v839 = vunpack.c.l.b16 %v437
      %v840 = vunpack.c.h.b16 %v437
      %v841 = vunpack.c.l.b16 %v438
      %v842 = vunpack.c.h.b16 %v438
      %v843 = vunpack.c.l.b16 %v439
      %v844 = vunpack.c.h.b16 %v439
      %v845 = vunpack.c.l.b16 %v440
      %v846 = vunpack.c.h.b16 %v440
      %v847 = vunpack.c.l.b16 %v441
      %v848 = vunpack.c.h.b16 %v441
      %v849 = vunpack.c.l.b16 %v442
      %v850 = vunpack.c.h.b16 %v442
      %v851 = vunpack.c.l.b16 %v443
      %v852 = vunpack.c.h.b16 %v443
      %v853 = vunpack.c.l.b16 %v444
      %v854 = vunpack.c.h.b16 %v444
      %v855 = vunpack.c.l.b16 %v445
      %v856 = vunpack.c.h.b16 %v445
      %v857 = vunpack.c.l.b16 %v446
      %v858 = vunpack.c.h.b16 %v446
      %v859 = vunpack.c.l.b16 %v447
      %v860 = vunpack.c.h.b16 %v447
      %v861 = vunpack.c.l.b16 %v448
      %v862 = vunpack.c.h.b16 %v448
      %v863 = vunpack.c.l.b16 %v449
      %v864 = vunpack.c.h.b16 %v449
      %v865 = vunpack.c.l.b16 %v450
      %v866 = vunpack.c.h.b16 %v450
      %v867 = vunpack.c.l.b16 %v451
      %v868 = vunpack.c.h.b16 %v451
      %v869 = vunpack.c.l.b16 %v452
      %v870 = vunpack.c.h.b16 %v452
      %v871 = vunpack.c.l.b16 %v453
      %v872 = vunpack.c.h.b16 %v453
      %v873 = vunpack.c.l.b16 %v454
      %v874 = vunpack.c.h.b16 %v454
      %v875 = vunpack.c.l.b16 %v455
      %v876 = vunpack.c.h.b16 %v455
      %v877 = vunpack.c.l.b16 %v456
      %v878 = vunpack.c.h.b16 %v456
      %v879 = vunpack.c.l.b16 %v457
      %v880 = vunpack.c.h.b16 %v457
      %v881 = vunpack.c.l.b16 %v458
      %v882 = vunpack.c.h.b16 %v458
      %v883 = vunpack.c.l.b16 %v459
      %v884 = vunpack.c.h.b16 %v459
      %v885 = vunpack.c.l.b16 %v460
      %v886 = vunpack.c.h.b16 %v460
      %v887 = vunpack.c.l.b16 %v461
      %v888 = vunpack.c.h.b16 %v461
      %v889 = vunpack.c.l.b16 %v462
      %v890 = vunpack.c.h.b16 %v462
      %v891 = vunpack.c.l.b16 %v463
      %v892 = vunpack.c.h.b16 %v463
      %v893 = vunpack.c.l.b16 %v464
      %v894 = vunpack.c.h.b16 %v464
      %v895 = vunpack.c.l.b16 %v465
      %v896 = vunpack.c.h.b16 %v465
      %v897 = vunpack.c.l.b16 %v466
      %v898 = vunpack.c.h.b16 %v466
      %v899 = vunpack.c.l.b16 %v467
      %v900 = vunpack.c.h.b16 %v467
      %v901 = vunpack.c.l.b16 %v468
      %v902 = vunpack.c.h.b16 %v468
      %v903 = vunpack.c.l.b16 %v469
      %v904 = vunpack.c.h.b16 %v469
      %v905 = vunpack.c.l.b16 %v470
      %v906 = vunpack.c.h.b16 %v470
      %v907 = vpack.c.b16 %v653, %v651
      %v908 = vpack.c.b16 %v654, %v652
      %v909 = vpack.c.b16 %v657, %v655
      %v910 = vpack.c.b16 %v658, %v656
      %v911 = vpack.c.b16 %v661, %v659
      %v912 = vpack.c.b16 %v662, %v660
      %v913 = vpack.c.b16 %v665, %v663
      %v914 = vpack.c.b16 %v666, %v664
      %v915 = vpack.c.b16 %v669, %v667
      %v916 = vpack.c.b16 %v670, %v668
      %v917 = vpack.c.b16 %v673, %v671
      %v918 = vpack.c.b16 %v674, %v672
      %v919 = vpack.c.b16 %v677, %v675
      %v920 = vpack.c.b16 %v678, %v676
      %v921 = vpack.c.b16 %v681, %v679
      %v922 = vpack.c.b16 %v682, %v680
      %v923 = vpack.c.b16 %v685, %v683
      %v924 = vpack.c.b16 %v686, %v684
      %v925 = vpack.c.b16 %v689, %v687
      %v926 = vpack.c.b16 %v690, %v688
      %v927 = vpack.c.b16 %v693, %v691
      %v928 = vpack.c.b16 %v694, %v692
      %v929 = vpack.c.b16 %v697, %v695
      %v930 = vpack.c.b16 %v698, %v696
      %v931 = vpack.c.b16 %v701, %v699
      %v932 = vpack.c.b16 %v702, %v700
      %v933 = vpack.c.b16 %v705, %v703
      %v934 = vpack.c.b16 %v706, %v704
      %v935 = vpack.c.b16 %v709, %v707
      %v936 = vpack.c.b16 %v710, %v708
      %v937 = vpack.c.b16 %v713, %v711
      %v938 = vpack.c.b16 %v714, %v712
      %v939 = vpack.c.b16 %v717, %v715
      %v940 = vpack.c.b16 %v718, %v716
      %v941 = vpack.c.b16 %v721, %v719
      %v942 = vpack.c.b16 %v722, %v720
      %v943 = vpack.c.b16 %v725, %v723
      %v944 = vpack.c.b16 %v726, %v724
      %v945 = vpack.c.b16 %v729, %v727
      %v946 = vpack.c.b16 %v730, %v728
      %v947 = vpack.c.b16 %v733, %v731
      %v948 = vpack.c.b16 %v734, %v732
      %v949 = vpack.c.b16 %v737, %v735
      %v950 = vpack.c.b16 %v738, %v736
      %v951 = vpack.c.b16 %v741, %v739
      %v952 = vpack.c.b16 %v742, %v740
      %v953 = vpack.c.b16 %v745, %v743
      %v954 = vpack.c.b16 %v746, %v744
      %v955 = vpack.c.b16 %v749, %v747
      %v956 = vpack.c.b16 %v750, %v748
      %v957 = vpack.c.b16 %v753, %v751
      %v958 = vpack.c.b16 %v754, %v752
      %v959 = vpack.c.b16 %v757, %v755
      %v960 = vpack.c.b16 %v758, %v756
      %v961 = vpack.c.b16 %v761, %v759
      %v962 = vpack.c.b16 %v762, %v760
      %v963 = vpack.c.b16 %v765, %v763
      %v964 = vpack.c.b16 %v766, %v764
      %v965 = vpack.c.b16 %v769, %v767
      %v966 = vpack.c.b16 %v770, %v768
      %v967 = vpack.c.b16 %v773, %v771
      %v968 = vpack.c.b16 %v774, %v772
      %v969 = vpack.c.b16 %v777, %v775
      %v970 = vpack.c.b16 %v778, %v776
      %v971 = vpack.c.b16 %v781, %v779
      %v972 = vpack.c.b16 %v782, %v780
      %v973 = vpack.c.b16 %v785, %v783
      %v974 = vpack.c.b16 %v786, %v784
      %v975 = vpack.c.b16 %v789, %v787
      %v976 = vpack.c.b16 %v790, %v788
      %v977 = vpack.c.b16 %v793, %v791
      %v978 = vpack.c.b16 %v794, %v792
      %v979 = vpack.c.b16 %v797, %v795
      %v980 = vpack.c.b16 %v798, %v796
      %v981 = vpack.c.b16 %v801, %v799
      %v982 = vpack.c.b16 %v802, %v800
      %v983 = vpack.c.b16 %v805, %v803
      %v984 = vpack.c.b16 %v806, %v804
      %v985 = vpack.c.b16 %v809, %v807
      %v986 = vpack.c.b16 %v810, %v808
      %v987 = vpack.c.b16 %v813, %v811
      %v988 = vpack.c.b16 %v814, %v812
      %v989 = vpack.c.b16 %v817, %v815
      %v990 = vpack.c.b16 %v818, %v816
      %v991 = vpack.c.b16 %v821, %v819
      %v992 = vpack.c.b16 %v822, %v820
      %v993 = vpack.c.b16 %v825, %v823
      %v994 = vpack.c.b16 %v826, %v824
      %v995 = vpack.c.b16 %v829, %v827
      %v996 = vpack.c.b16 %v830, %v828
      %v997 = vpack.c.b16 %v833, %v831
      %v998 = vpack.c.b16 %v834, %v832
      %v999 = vpack.c.b16 %v837, %v835
      %v1000 = vpack.c.b16 %v838, %v836
      %v1001 = vpack.c.b16 %v841, %v839
      %v1002 = vpack.c.b16 %v842, %v840
      %v1003 = vpack.c.b16 %v845, %v843
      %v1004 = vpack.c.b16 %v846, %v844
      %v1005 = vpack.c.b16 %v849, %v847
      %v1006 = vpack.c.b16 %v850, %v848
      %v1007 = vpack.c.b16 %v853, %v851
      %v1008 = vpack.c.b16 %v854, %v852
      %v1009 = vpack.c.b16 %v857, %v855
      %v1010 = vpack.c.b16 %v858, %v856
      %v1011 = vpack.c.b16 %v861, %v859
      %v1012 = vpack.c.b16 %v862, %v860
      %v1013 = vpack.c.b16 %v865, %v863
      %v1014 = vpack.c.b16 %v866, %v864
      %v1015 = vpack.c.b16 %v869, %v867
      %v1016 = vpack.c.b16 %v870, %v868
      %v1017 = vpack.c.b16 %v873, %v871
      %v1018 = vpack.c.b16 %v874, %v872
      %v1019 = vpack.c.b16 %v877, %v875
      %v1020 = vpack.c.b16 %v878, %v876
      %v1021 = vpack.c.b16 %v881, %v879
      %v1022 = vpack.c.b16 %v882, %v880
      %v1023 = vpack.c.b16 %v885, %v883
      %v1024 = vpack.c.b16 %v886, %v884
      %v1025 = vpack.c.b16 %v889, %v887
      %v1026 = vpack.c.b16 %v890, %v888
      %v1027 = vpack.c.b16 %v893, %v891
      %v1028 = vpack.c.b16 %v894, %v892
      %v1029 = vpack.c.b16 %v897, %v895
      %v1030 = vpack.c.b16 %v898, %v896
      %v1031 = vpack.c.b16 %v901, %v899
      %v1032 = vpack.c.b16 %v902, %v900
      %v1033 = vpack.c.b16 %v905, %v903
      %v1034 = vpack.c.b16 %v906, %v904
      %1163 = vmatprep.subr.bf16.mxu0 %v908
      %1164 = vmatpush1.bf16.msra.mxu0 %v907
      %1165 = vmatprep.subr.bf16.mxu0 %v910
      %1166 = vmatpush1.bf16.msra.mxu0 %v909
      %1167 = vmatprep.subr.bf16.mxu0 %v912
      %1168 = vmatpush1.bf16.msra.mxu0 %v911
      %1169 = vmatprep.subr.bf16.mxu0 %v914
      %1170 = vmatpush1.bf16.msra.mxu0 %v913
      %1171 = vmatprep.subr.bf16.mxu0 %v916
      %1172 = vmatpush1.bf16.msra.mxu0 %v915
      %1173 = vmatprep.subr.bf16.mxu0 %v918
      %1174 = vmatpush1.bf16.msra.mxu0 %v917
      %1175 = vmatprep.subr.bf16.mxu0 %v920
      %1176 = vmatpush1.bf16.msra.mxu0 %v919
      %1177 = vmatprep.subr.bf16.mxu0 %v922
      %1178 = vmatpush1.bf16.msra.mxu0 %v921
      %1179 = vmatprep.subr.bf16.mxu0 %v924
      %1180 = vmatpush1.bf16.msra.mxu0 %v923
      %1181 = vmatprep.subr.bf16.mxu0 %v926
      %1182 = vmatpush1.bf16.msra.mxu0 %v925
      %1183 = vmatprep.subr.bf16.mxu0 %v928
      %1184 = vmatpush1.bf16.msra.mxu0 %v927
      %1185 = vmatprep.subr.bf16.mxu0 %v930
      %1186 = vmatpush1.bf16.msra.mxu0 %v929
      %1187 = vmatprep.subr.bf16.mxu0 %v932
      %1188 = vmatpush1.bf16.msra.mxu0 %v931
      %1189 = vmatprep.subr.bf16.mxu0 %v934
      %1190 = vmatpush1.bf16.msra.mxu0 %v933
      %1191 = vmatprep.subr.bf16.mxu0 %v936
      %1192 = vmatpush1.bf16.msra.mxu0 %v935
      %1193 = vmatprep.subr.bf16.mxu0 %v938
      %1194 = vmatpush1.bf16.msra.mxu0 %v937
      %1195 = vmatprep.mubr.bf16.mxu0 %v508
      %1196 = vmatmul.mubr.bf16.gmra.mrb[0].mxu0 %v507
      %v1197 = vpop.f32.mrb[0].mxu0
      %v1198 = vadd.f32 %v476, %v1197
      %v1199 = vpop.f32.mrb[0].mxu0
      %v1200 = vadd.f32 %v480, %v1199
      %v1201 = vpop.f32.mrb[0].mxu0
      %v1202 = vadd.f32 %v476, %v1201
      %v1203 = vpop.f32.mrb[0].mxu0
      %v1204 = vadd.f32 %v480, %v1203
      %1205 = vdwg.mxu0
      %1206 = vmatprep.subr.bf16.mxu0 %v940
      %1207 = vmatpush1.bf16.msra.mxu0 %v939
      %1208 = vmatprep.subr.bf16.mxu0 %v942
      %1209 = vmatpush1.bf16.msra.mxu0 %v941
      %1210 = vmatprep.subr.bf16.mxu0 %v944
      %1211 = vmatpush1.bf16.msra.mxu0 %v943
      %1212 = vmatprep.subr.bf16.mxu0 %v946
      %1213 = vmatpush1.bf16.msra.mxu0 %v945
      %1214 = vmatprep.subr.bf16.mxu0 %v948
      %1215 = vmatpush1.bf16.msra.mxu0 %v947
      %1216 = vmatprep.subr.bf16.mxu0 %v950
      %1217 = vmatpush1.bf16.msra.mxu0 %v949
      %1218 = vmatprep.subr.bf16.mxu0 %v952
      %1219 = vmatpush1.bf16.msra.mxu0 %v951
      %1220 = vmatprep.subr.bf16.mxu0 %v954
      %1221 = vmatpush1.bf16.msra.mxu0 %v953
      %1222 = vmatprep.subr.bf16.mxu0 %v956
      %1223 = vmatpush1.bf16.msra.mxu0 %v955
      %1224 = vmatprep.subr.bf16.mxu0 %v958
      %1225 = vmatpush1.bf16.msra.mxu0 %v957
      %1226 = vmatprep.subr.bf16.mxu0 %v960
      %1227 = vmatpush1.bf16.msra.mxu0 %v959
      %1228 = vmatprep.subr.bf16.mxu0 %v962
      %1229 = vmatpush1.bf16.msra.mxu0 %v961
      %1230 = vmatprep.subr.bf16.mxu0 %v964
      %1231 = vmatpush1.bf16.msra.mxu0 %v963
      %1232 = vmatprep.subr.bf16.mxu0 %v966
      %1233 = vmatpush1.bf16.msra.mxu0 %v965
      %1234 = vmatprep.subr.bf16.mxu0 %v968
      %1235 = vmatpush1.bf16.msra.mxu0 %v967
      %1236 = vmatprep.subr.bf16.mxu0 %v970
      %1237 = vmatpush1.bf16.msra.mxu0 %v969
      %1238 = vmatprep.mubr.bf16.mxu0 %v510
      %1239 = vmatmul.mubr.bf16.gmra.mrb[0].mxu0 %v509
      %v1240 = vpop.f32.mrb[0].mxu0
      %v1241 = vadd.f32 %v1198, %v1240
      %v1242 = vpop.f32.mrb[0].mxu0
      %v1243 = vadd.f32 %v1200, %v1242
      %v1244 = vpop.f32.mrb[0].mxu0
      %v1245 = vadd.f32 %v1202, %v1244
      %v1246 = vpop.f32.mrb[0].mxu0
      %v1247 = vadd.f32 %v1204, %v1246
      %1248 = vdwg.mxu0
      %1249 = vmatprep.subr.bf16.mxu0 %v972
      %1250 = vmatpush1.bf16.msra.mxu0 %v971
      %1251 = vmatprep.subr.bf16.mxu0 %v974
      %1252 = vmatpush1.bf16.msra.mxu0 %v973
      %1253 = vmatprep.subr.bf16.mxu0 %v976
      %1254 = vmatpush1.bf16.msra.mxu0 %v975
      %1255 = vmatprep.subr.bf16.mxu0 %v978
      %1256 = vmatpush1.bf16.msra.mxu0 %v977
      %1257 = vmatprep.subr.bf16.mxu0 %v980
      %1258 = vmatpush1.bf16.msra.mxu0 %v979
      %1259 = vmatprep.subr.bf16.mxu0 %v982
      %1260 = vmatpush1.bf16.msra.mxu0 %v981
      %1261 = vmatprep.subr.bf16.mxu0 %v984
      %1262 = vmatpush1.bf16.msra.mxu0 %v983
      %1263 = vmatprep.subr.bf16.mxu0 %v986
      %1264 = vmatpush1.bf16.msra.mxu0 %v985
      %1265 = vmatprep.subr.bf16.mxu0 %v988
      %1266 = vmatpush1.bf16.msra.mxu0 %v987
      %1267 = vmatprep.subr.bf16.mxu0 %v990
      %1268 = vmatpush1.bf16.msra.mxu0 %v989
      %1269 = vmatprep.subr.bf16.mxu0 %v992
      %1270 = vmatpush1.bf16.msra.mxu0 %v991
      %1271 = vmatprep.subr.bf16.mxu0 %v994
      %1272 = vmatpush1.bf16.msra.mxu0 %v993
      %1273 = vmatprep.subr.bf16.mxu0 %v996
      %1274 = vmatpush1.bf16.msra.mxu0 %v995
      %1275 = vmatprep.subr.bf16.mxu0 %v998
      %1276 = vmatpush1.bf16.msra.mxu0 %v997
      %1277 = vmatprep.subr.bf16.mxu0 %v1000
      %1278 = vmatpush1.bf16.msra.mxu0 %v999
      %1279 = vmatprep.subr.bf16.mxu0 %v1002
      %1280 = vmatpush1.bf16.msra.mxu0 %v1001
      %1281 = vmatprep.mubr.bf16.mxu0 %v512
      %1282 = vmatmul.mubr.bf16.gmra.mrb[0].mxu0 %v511
      %v1283 = vpop.f32.mrb[0].mxu0
      %v1284 = vadd.f32 %v1241, %v1283
      %v1285 = vpop.f32.mrb[0].mxu0
      %v1286 = vadd.f32 %v1243, %v1285
      %v1287 = vpop.f32.mrb[0].mxu0
      %v1288 = vadd.f32 %v1245, %v1287
      %v1289 = vpop.f32.mrb[0].mxu0
      %v1290 = vadd.f32 %v1247, %v1289
      %1291 = vdwg.mxu0
      %1292 = vmatprep.subr.bf16.mxu0 %v1004
      %1293 = vmatpush1.bf16.msra.mxu0 %v1003
      %1294 = vmatprep.subr.bf16.mxu0 %v1006
      %1295 = vmatpush1.bf16.msra.mxu0 %v1005
      %1296 = vmatprep.subr.bf16.mxu0 %v1008
      %1297 = vmatpush1.bf16.msra.mxu0 %v1007
      %1298 = vmatprep.subr.bf16.mxu0 %v1010
      %1299 = vmatpush1.bf16.msra.mxu0 %v1009
      %1300 = vmatprep.subr.bf16.mxu0 %v1012
      %1301 = vmatpush1.bf16.msra.mxu0 %v1011
      %1302 = vmatprep.subr.bf16.mxu0 %v1014
      %1303 = vmatpush1.bf16.msra.mxu0 %v1013
      %1304 = vmatprep.subr.bf16.mxu0 %v1016
      %1305 = vmatpush1.bf16.msra.mxu0 %v1015
      %1306 = vmatprep.subr.bf16.mxu0 %v1018
      %1307 = vmatpush1.bf16.msra.mxu0 %v1017
      %1308 = vmatprep.subr.bf16.mxu0 %v1020
      %1309 = vmatpush1.bf16.msra.mxu0 %v1019
      %1310 = vmatprep.subr.bf16.mxu0 %v1022
      %1311 = vmatpush1.bf16.msra.mxu0 %v1021
      %1312 = vmatprep.subr.bf16.mxu0 %v1024
      %1313 = vmatpush1.bf16.msra.mxu0 %v1023
      %1314 = vmatprep.subr.bf16.mxu0 %v1026
      %1315 = vmatpush1.bf16.msra.mxu0 %v1025
      %1316 = vmatprep.subr.bf16.mxu0 %v1028
      %1317 = vmatpush1.bf16.msra.mxu0 %v1027
      %1318 = vmatprep.subr.bf16.mxu0 %v1030
      %1319 = vmatpush1.bf16.msra.mxu0 %v1029
      %1320 = vmatprep.subr.bf16.mxu0 %v1032
      %1321 = vmatpush1.bf16.msra.mxu0 %v1031
      %1322 = vmatprep.subr.bf16.mxu0 %v1034
      %1323 = vmatpush1.bf16.msra.mxu0 %v1033
      %1324 = vmatprep.mubr.bf16.mxu0 %v514
      %1325 = vmatmul.mubr.bf16.gmra.mrb[0].mxu0 %v513
      %v1326 = vpop.f32.mrb[0].mxu0
      %v1327 = vadd.f32 %v1284, %v1326
      %v1328 = vpop.f32.mrb[0].mxu0
      %v1329 = vadd.f32 %v1286, %v1328
      %v1330 = vpop.f32.mrb[0].mxu0
      %v1331 = vadd.f32 %v1288, %v1330
      %v1332 = vpop.f32.mrb[0].mxu0
      %v1333 = vadd.f32 %v1290, %v1332
      %1334 = vdwg.mxu0
      %vm1335 = vcmp.ge.f32.partialorder %v1327, 0.0
      %vm1336 = vcmp.ge.f32.partialorder %v1329, 0.0
      %vm1337 = vcmp.ge.f32.partialorder %v1331, 0.0
      %vm1338 = vcmp.ge.f32.partialorder %v1333, 0.0
      %v1339 = vmul.f32 %v1327, 0.01
      %v1340 = vmul.f32 %v1329, 0.01
      %v1341 = vmul.f32 %v1331, 0.01
      %v1342 = vmul.f32 %v1333, 0.01
      %v1343 = vsel %vm1335, %v1327, %v1339
      %v1344 = vsel %vm1336, %v1329, %v1340
      %v1345 = vsel %vm1337, %v1331, %v1341
      %v1346 = vsel %vm1338, %v1333, %v1342
      %v1347 = vld [vmem:[%s4] sm:$0xff]
      %v1348 = vld [vmem:[%s4 + $0x8] sm:$0xff]
      %v1349 = vld [vmem:[%s4 + $0x10] sm:$0xff]
      %v1350 = vld [vmem:[%s4 + $0x18] sm:$0xff]
      %v1351 = vld [vmem:[%s4 + $0x20] sm:$0xff]
      %v1352 = vld [vmem:[%s4 + $0x28] sm:$0xff]
      %v1353 = vld [vmem:[%s4 + $0x30] sm:$0xff]
      %v1354 = vld [vmem:[%s4 + $0x38] sm:$0xff]
      %v1355 = vld [vmem:[%s4 + $0x40] sm:$0xff]
      %v1356 = vld [vmem:[%s4 + $0x48] sm:$0xff]
      %v1357 = vld [vmem:[%s4 + $0x50] sm:$0xff]
      %v1358 = vld [vmem:[%s4 + $0x58] sm:$0xff]
      %v1359 = vld [vmem:[%s4 + $0x60] sm:$0xff]
      %v1360 = vld [vmem:[%s4 + $0x68] sm:$0xff]
      %v1361 = vld [vmem:[%s4 + $0x70] sm:$0xff]
      %v1362 = vld [vmem:[%s4 + $0x78] sm:$0xff]
      %v1363 = vld [vmem:[%s4 + $0x80] sm:$0xff]
      %v1364 = vld [vmem:[%s4 + $0x88] sm:$0xff]
      %v1365 = vld [vmem:[%s4 + $0x90] sm:$0xff]
      %v1366 = vld [vmem:[%s4 + $0x98] sm:$0xff]
      %v1367 = vld [vmem:[%s4 + $0xa0] sm:$0xff]
      %v1368 = vld [vmem:[%s4 + $0xa8] sm:$0xff]
      %v1369 = vld [vmem:[%s4 + $0xb0] sm:$0xff]
      %v1370 = vld [vmem:[%s4 + $0xb8] sm:$0xff]
      %v1371 = vld [vmem:[%s4 + $0xc0] sm:$0xff]
      %v1372 = vld [vmem:[%s4 + $0xc8] sm:$0xff]
      %v1373 = vld [vmem:[%s4 + $0xd0] sm:$0xff]
      %v1374 = vld [vmem:[%s4 + $0xd8] sm:$0xff]
      %v1375 = vld [vmem:[%s4 + $0xe0] sm:$0xff]
      %v1376 = vld [vmem:[%s4 + $0xe8] sm:$0xff]
      %v1377 = vld [vmem:[%s4 + $0xf0] sm:$0xff]
      %v1378 = vld [vmem:[%s4 + $0xf8] sm:$0xff]
      %v1379 = vld [vmem:[%s324] sm:$0x1]
      %v1381 = vlaneseq
      %v1382 = vshrl.u32 %v1381, 7
      %v1383 = vsub.s32 0, %v1382
      %v1384 = vrot.slane %v1379, %v1383
      %1386 = vmatprep.subr.mxu0 0.0
      %1387 = vmatpush1.msra.mxu0 %v1347
      %1388 = vmatprep.subr.mxu0 0.0
      %1389 = vmatpush1.msra.mxu0 %v1348
      %1390 = vmatprep.subr.mxu0 0.0
      %1391 = vmatpush1.msra.mxu0 %v1349
      %1392 = vmatprep.subr.mxu0 0.0
      %1393 = vmatpush1.msra.mxu0 %v1350
      %1394 = vmatprep.subr.mxu0 0.0
      %1395 = vmatpush1.msra.mxu0 %v1351
      %1396 = vmatprep.subr.mxu0 0.0
      %1397 = vmatpush1.msra.mxu0 %v1352
      %1398 = vmatprep.subr.mxu0 0.0
      %1399 = vmatpush1.msra.mxu0 %v1353
      %1400 = vmatprep.subr.mxu0 0.0
      %1401 = vmatpush1.msra.mxu0 %v1354
      %1402 = vmatprep.subr.mxu0 0.0
      %1403 = vmatpush1.msra.mxu0 %v1355
      %1404 = vmatprep.subr.mxu0 0.0
      %1405 = vmatpush1.msra.mxu0 %v1356
      %1406 = vmatprep.subr.mxu0 0.0
      %1407 = vmatpush1.msra.mxu0 %v1357
      %1408 = vmatprep.subr.mxu0 0.0
      %1409 = vmatpush1.msra.mxu0 %v1358
      %1410 = vmatprep.subr.mxu0 0.0
      %1411 = vmatpush1.msra.mxu0 %v1359
      %1412 = vmatprep.subr.mxu0 0.0
      %1413 = vmatpush1.msra.mxu0 %v1360
      %1414 = vmatprep.subr.mxu0 0.0
      %1415 = vmatpush1.msra.mxu0 %v1361
      %1416 = vmatprep.subr.mxu0 0.0
      %1417 = vmatpush1.msra.mxu0 %v1362
      %1418 = vmatprep.subr.mxu0 0.0
      %1419 = vmatpush1.msra.mxu0 %v1363
      %1420 = vmatprep.subr.mxu0 0.0
      %1421 = vmatpush1.msra.mxu0 %v1364
      %1422 = vmatprep.subr.mxu0 0.0
      %1423 = vmatpush1.msra.mxu0 %v1365
      %1424 = vmatprep.subr.mxu0 0.0
      %1425 = vmatpush1.msra.mxu0 %v1366
      %1426 = vmatprep.subr.mxu0 0.0
      %1427 = vmatpush1.msra.mxu0 %v1367
      %1428 = vmatprep.subr.mxu0 0.0
      %1429 = vmatpush1.msra.mxu0 %v1368
      %1430 = vmatprep.subr.mxu0 0.0
      %1431 = vmatpush1.msra.mxu0 %v1369
      %1432 = vmatprep.subr.mxu0 0.0
      %1433 = vmatpush1.msra.mxu0 %v1370
      %1434 = vmatprep.subr.mxu0 0.0
      %1435 = vmatpush1.msra.mxu0 %v1371
      %1436 = vmatprep.subr.mxu0 0.0
      %1437 = vmatpush1.msra.mxu0 %v1372
      %1438 = vmatprep.subr.mxu0 0.0
      %1439 = vmatpush1.msra.mxu0 %v1373
      %1440 = vmatprep.subr.mxu0 0.0
      %1441 = vmatpush1.msra.mxu0 %v1374
      %1442 = vmatprep.subr.mxu0 0.0
      %1443 = vmatpush1.msra.mxu0 %v1375
      %1444 = vmatprep.subr.mxu0 0.0
      %1445 = vmatpush1.msra.mxu0 %v1376
      %1446 = vmatprep.subr.mxu0 0.0
      %1447 = vmatpush1.msra.mxu0 %v1377
      %1448 = vmatprep.subr.mxu0 0.0
      %1449 = vmatpush1.msra.mxu0 %v1378
      %1450 = vmatprep.mubr.f32.mxu0 %v1344
      %1451 = vmatmul.mubr.f32.gmra.mrb[0].mxu0 %v1343
      %v1452 = vpop.f32.mrb[0].mxu0
      %v1453 = vadd.f32 %v1384, %v1452
      %v1454 = vpop.f32.mrb[0].mxu0
      %1455 = vmatprep.mubr.f32.mxu0 %v1346
      %1456 = vmatmul.mubr.f32.gmra.mrb[0].mxu0 %v1345
      %v1457 = vpop.f32.mrb[0].mxu0
      %v1458 = vadd.f32 %v1384, %v1457
      %v1459 = vpop.f32.mrb[0].mxu0
      %1460 = vdwg.mxu0
      %vm1461 = vcmp.ge.f32.partialorder %v1453, 0.0
      %vm1462 = vcmp.ge.f32.partialorder %v1458, 0.0
      %v1463 = vmul.f32 %v1453, 0.01
      %v1464 = vmul.f32 %v1458, 0.01
      %v1465 = vsel %vm1461, %v1453, %v1463
      %v1466 = vsel %vm1462, %v1458, %v1464
      %v1467 = vld [vmem:[%s5] sm:$0xff]
      %v1468 = vld [vmem:[%s5 + $0x8] sm:$0xff]
      %v1469 = vld [vmem:[%s5 + $0x10] sm:$0xff]
      %v1470 = vld [vmem:[%s5 + $0x18] sm:$0xff]
      %v1471 = vld [vmem:[%s5 + $0x20] sm:$0xff]
      %v1472 = vld [vmem:[%s5 + $0x28] sm:$0xff]
      %v1473 = vld [vmem:[%s5 + $0x30] sm:$0xff]
      %v1474 = vld [vmem:[%s5 + $0x38] sm:$0xff]
      %v1475 = vld [vmem:[%s5 + $0x40] sm:$0xff]
      %v1476 = vld [vmem:[%s5 + $0x48] sm:$0xff]
      %v1477 = vld [vmem:[%s5 + $0x50] sm:$0xff]
      %v1478 = vld [vmem:[%s5 + $0x58] sm:$0xff]
      %v1479 = vld [vmem:[%s5 + $0x60] sm:$0xff]
      %v1480 = vld [vmem:[%s5 + $0x68] sm:$0xff]
      %v1481 = vld [vmem:[%s5 + $0x70] sm:$0xff]
      %v1482 = vld [vmem:[%s5 + $0x78] sm:$0xff]
      %v1483 = vld [vmem:[%s6] sm:$0x1]
      %v1485 = vlaneseq
      %v1486 = vshrl.u32 %v1485, 7
      %v1487 = vsub.s32 0, %v1486
      %v1488 = vrot.slane %v1483, %v1487
      %1490 = vmatprep.subr.mxu0 0.0
      %1491 = vmatpush1.msra.mxu0 %v1467
      %1492 = vmatprep.subr.mxu0 0.0
      %1493 = vmatpush1.msra.mxu0 %v1468
      %1494 = vmatprep.subr.mxu0 0.0
      %1495 = vmatpush1.msra.mxu0 %v1469
      %1496 = vmatprep.subr.mxu0 0.0
      %1497 = vmatpush1.msra.mxu0 %v1470
      %1498 = vmatprep.subr.mxu0 0.0
      %1499 = vmatpush1.msra.mxu0 %v1471
      %1500 = vmatprep.subr.mxu0 0.0
      %1501 = vmatpush1.msra.mxu0 %v1472
      %1502 = vmatprep.subr.mxu0 0.0
      %1503 = vmatpush1.msra.mxu0 %v1473
      %1504 = vmatprep.subr.mxu0 0.0
      %1505 = vmatpush1.msra.mxu0 %v1474
      %1506 = vmatprep.subr.mxu0 0.0
      %1507 = vmatpush1.msra.mxu0 %v1475
      %1508 = vmatprep.subr.mxu0 0.0
      %1509 = vmatpush1.msra.mxu0 %v1476
      %1510 = vmatprep.subr.mxu0 0.0
      %1511 = vmatpush1.msra.mxu0 %v1477
      %1512 = vmatprep.subr.mxu0 0.0
      %1513 = vmatpush1.msra.mxu0 %v1478
      %1514 = vmatprep.subr.mxu0 0.0
      %1515 = vmatpush1.msra.mxu0 %v1479
      %1516 = vmatprep.subr.mxu0 0.0
      %1517 = vmatpush1.msra.mxu0 %v1480
      %1518 = vmatprep.subr.mxu0 0.0
      %1519 = vmatpush1.msra.mxu0 %v1481
      %1520 = vmatprep.subr.mxu0 0.0
      %1521 = vmatpush1.msra.mxu0 %v1482
      %1522 = vmatprep.subr.mxu0 0.0
      %1523 = vmatpush1.msra.mxu0 0.0
      %1524 = vmatprep.subr.mxu0 0.0
      %1525 = vmatpush1.msra.mxu0 0.0
      %1526 = vmatprep.subr.mxu0 0.0
      %1527 = vmatpush1.msra.mxu0 0.0
      %1528 = vmatprep.subr.mxu0 0.0
      %1529 = vmatpush1.msra.mxu0 0.0
      %1530 = vmatprep.subr.mxu0 0.0
      %1531 = vmatpush1.msra.mxu0 0.0
      %1532 = vmatprep.subr.mxu0 0.0
      %1533 = vmatpush1.msra.mxu0 0.0
      %1534 = vmatprep.subr.mxu0 0.0
      %1535 = vmatpush1.msra.mxu0 0.0
      %1536 = vmatprep.subr.mxu0 0.0
      %1537 = vmatpush1.msra.mxu0 0.0
      %1538 = vmatprep.subr.mxu0 0.0
      %1539 = vmatpush1.msra.mxu0 0.0
      %1540 = vmatprep.subr.mxu0 0.0
      %1541 = vmatpush1.msra.mxu0 0.0
      %1542 = vmatprep.subr.mxu0 0.0
      %1543 = vmatpush1.msra.mxu0 0.0
      %1544 = vmatprep.subr.mxu0 0.0
      %1545 = vmatpush1.msra.mxu0 0.0
      %1546 = vmatprep.subr.mxu0 0.0
      %1547 = vmatpush1.msra.mxu0 0.0
      %1548 = vmatprep.subr.mxu0 0.0
      %1549 = vmatpush1.msra.mxu0 0.0
      %1550 = vmatprep.subr.mxu0 0.0
      %1551 = vmatpush1.msra.mxu0 0.0
      %1552 = vmatprep.subr.mxu0 0.0
      %1553 = vmatpush1.msra.mxu0 0.0
      %1554 = vmatprep.mubr.f32.mxu0 0.0
      %1555 = vmatmul.mubr.f32.gmra.mrb[0].mxu0 %v1465
      %v1556 = vpop.f32.mrb[0].mxu0
      %v1557 = vadd.f32 %v1488, %v1556
      %v1558 = vpop.f32.mrb[0].mxu0
      %1559 = vmatprep.mubr.f32.mxu0 0.0
      %1560 = vmatmul.mubr.f32.gmra.mrb[0].mxu0 %v1466
      %v1561 = vpop.f32.mrb[0].mxu0
      %v1562 = vadd.f32 %v1488, %v1561
      %v1563 = vpop.f32.mrb[0].mxu0
      %1564 = vdwg.mxu0
      %vm1565 = vcmp.ge.f32.partialorder %v1557, 0.0
      %vm1566 = vcmp.ge.f32.partialorder %v1562, 0.0
      %v1567 = vmul.f32 %v1557, 0.01
      %v1568 = vmul.f32 %v1562, 0.01
      %v1569 = vsel %vm1565, %v1557, %v1567
      %v1570 = vsel %vm1566, %v1562, %v1568
      %1571 = vst [vmem:[%s333] sm:$0xff] %v1569
      %1572 = vst [vmem:[%s333 + $0x8] sm:$0xff] %v1570
      %s1573 = smul.u32 2, %s23
      %p1574 = scmp.lt.s32.totalorder %s22, 1
      %s1575 = scalar_select %p1574, %s22, 1
      %p1576 = scmp.lt.s32.totalorder %s1573, 1
      %s1577 = scalar_select %p1576, %s1573, 1
      %s1578 = smul.addr %s1575, 2
      %s1579 = sadd.s32 %s1577, %s1578
      %s1580 = smul.addr %s1579, 8
      %s1581 = scalar_lea.vmem %s7, %s1580
      // Predicated region
      $region49: #{pmask_net_forward.2} parent=47 // pred_check
        %p1582 = pneg %p209
      $region50: #{pmask_net_forward.2} parent=47 // pred_check_branch
        %1584 = sbr.rel (%p1582) target = $region52
      $region51: #{pmask_net_forward.2} parent=47 // pred_region
        %s1585 = smul.u32 2, %s23
      $region52: #{pmask_net_forward.2} parent=47 // pred_fallthru
        _
    $region48: #{pmask_net_forward.2} parent=5 // pred_fallthru
      _
    %p1586 = scmp.le.s32.totalorder 2, %s13
    // Predicated region
    $region53: #{pmask_net_forward.2} parent=5 // pred_check
      %p1587 = pneg %p1586
    $region54: #{pmask_net_forward.2} parent=5 // pred_check_branch
      %1589 = sbr.rel (%p1587) target = $region56
    $region55: #{pmask_net_forward.2} parent=5 // pred_region
      %s1590 = ssub.s32 %s13, 2
      // Predicated region
      $region57: #{pmask_net_forward.2} parent=55 // pred_check
        %p1591 = pneg %p215
      $region58: #{pmask_net_forward.2} parent=55 // pred_check_branch
        %1593 = sbr.rel (%p1591) target = $region60
      $region59: #{pmask_net_forward.2} parent=55 // pred_region
        %s1594 = smul.u32 2, %s25
        %p1595 = scmp.lt.s32.totalorder %s24, 1
        %s1596 = scalar_select %p1595, %s24, 1
        %p1597 = scmp.lt.s32.totalorder %s1594, 1
        %s1598 = scalar_select %p1597, %s1594, 1
        %s1599 = smul.addr %s1596, 2
        %s1600 = sadd.s32 %s1598, %s1599
        %s1601 = smul.addr %s1600, 8
        %s1602 = scalar_lea.vmem %s7, %s1601
      $region60: #{pmask_net_forward.2} parent=55 // pred_fallthru
        _
    $region56: #{pmask_net_forward.2} parent=5 // pred_fallthru
      _
  $region6: #{pmask_net_forward.2} parent=0 // loop_footer
    %s17 = sadd.s32 1, %s13
  $region7: #{pmask_net_forward.2} parent=0 // loop_footer_branch
    %12 = sbr.rel target = $region3
  $region8: #{pmask_net_forward.2} parent=0 // loop_exit
    _

// kernel: pmask_net_forward.3
$region0: #{pmask_net_forward.3}
  #allocation0 [shape = 'u32[]', space=smem, size = 0x4, offset = 0x4, fixed_abs, tag = 'smem constant byte address 0x4 - core index']
  #allocation1 [shape = 'u32[144,128]{1,0:T(1,128)}', space=vmem, size = 0x12000, scoped, tag = 'internal scratch']
  #allocation2 [shape = 'f32[1,1]{1,0:T(1,128)S(1)}', space=vmem, size = 0x200, scoped, tag = 'scoped memory for pmask_net_forward.3']
  %s0 = inlined_call_operand.vmem [shape: f32[2,128,135], index: 0, kind: input, shape index: {}]
  %s1 = inlined_call_operand.vmem [shape: f32[135,64], index: 1, kind: input, shape index: {}]
  %s2 = inlined_call_operand.vmem [shape: f32[1,64], index: 2, kind: input, shape index: {}]
  %s3 = inlined_call_operand.vmem [shape: f32[64,32], index: 3, kind: input, shape index: {}]
  %s4 = inlined_call_operand.vmem [shape: f32[1,32], index: 4, kind: input, shape index: {}]
  %s5 = inlined_call_operand.vmem [shape: f32[1,32], index: 5, kind: input, shape index: {}]
  %s6 = inlined_call_operand.<no memory space> [shape: f32[1,1], index: 6, kind: input, shape index: {}]
  %s7 = inlined_call_operand.vmem [shape: f32[2,1,128], index: 7, kind: output, shape index: {}]
  %s8 = sld [smem:[#allocation0]]
  $region61: #{pmask_net_forward.3} parent=0
    _
  %s10 = ssub.s32 1, %s8
  %s11 = scalar_select 0, %s10, %s8
  %v12 = vstv %s6
  %13 = vst [vmem:[#allocation2] sm:$0x1] %v12
  loop: start=0, step=1, limit=4
  $region2: #{pmask_net_forward.3} parent=0 // loop_pre_header
    _
  $region3: #{pmask_net_forward.3} parent=0 // loop_header
    %s15 = sphi 0, %s19
    %p16 = scmp.ge.s32.totalorder %s15, 4
    %s22 = sphi 0, %s34
    %s23 = sphi 0, %s30
    %s24 = sphi 0, %s22
    %s25 = sphi 0, %s23
    %s26 = sphi 0, %s24
    %s27 = sphi 0, %s25
    %s39 = sphi 0, %s41
    %s42 = sphi 0, %s39
    %s43 = sphi 0, %s42
    %s59 = sphi 0, %s43
    %s63 = sphi 0, %s63
    %s65 = sphi 0, %s63
    %s66 = sphi 0, %s65
    %s80 = sphi 0, %s66
    %s84 = sphi 0, %s84
    %s86 = sphi 0, %s84
    %s87 = sphi 0, %s86
    %s101 = sphi 0, %s87
    %s105 = sphi 0, %s105
    %s107 = sphi 0, %s105
    %s108 = sphi 0, %s107
    %s122 = sphi 0, %s108
    %s126 = sphi 0, %s126
    %s128 = sphi 0, %s126
    %s129 = sphi 0, %s128
    %s143 = sphi 0, %s129
    %s147 = sphi 0, %s147
    %s149 = sphi 0, %s147
    %s150 = sphi 0, %s149
    %s164 = sphi 0, %s150
    %s168 = sphi 0, %s168
    %s170 = sphi 0, %s168
    %s171 = sphi 0, %s170
    %s185 = sphi 0, %s171
    %s193 = sphi 0, %s195
    %s196 = sphi 0, %s193
    %s197 = sphi 0, %s196
    %s213 = sphi 0, %s197
  $region4: #{pmask_net_forward.3} parent=0 // loop_header_branch
    %18 = sbr.rel (%p16) target = $region8
  $region5: #{pmask_net_forward.3} parent=0 // loop_body
    %s20 = ssub.s32 %s15, 1
    %s21 = ssub.s32 %s15, 2
    %s28 = sadd.s32 1, %s23
    %p29 = scmp.ge.s32.totalorder %s28, 1
    %s30 = scalar_select %p29, 0, %s28
    %s31 = sadd.s32 1, %s22
    %s32 = scalar_select %p29, %s31, %s22
    %p33 = scmp.ge.s32.totalorder %s32, 2
    %s34 = scalar_select %p33, 0, %s32
    %s35 = ssub.s32 %s22, %s34
    %s36 = ssub.s32 %s23, %s30
    %s37 = sor.u32 %s35, %s36
    %p38 = scmp.eq.s32.totalorder %s37, 0
    %s40 = sadd.s32 %s39, 1
    %s41 = scalar_select %p38, %s39, %s40
    %p44 = pneg %p38
    %p45 = scmp.eq.s32.totalorder %s15, 1
    %p46 = por %p44, %p45
    %p47 = scmp.ne.s32.totalorder %s39, %s42
    %p48 = scmp.eq.s32.totalorder %s15, 0
    %p49 = por %p47, %p48
    %p50 = scmp.ne.s32.totalorder %s39, %s42
    %p51 = scmp.eq.s32.totalorder %s20, 1
    %p52 = por %p50, %p51
    %p53 = scmp.ne.s32.totalorder %s42, %s43
    %p54 = scmp.eq.s32.totalorder %s20, 0
    %p55 = por %p53, %p54
    %p56 = scmp.ne.s32.totalorder %s42, %s43
    %p57 = scmp.eq.s32.totalorder %s21, 1
    %p58 = por %p56, %p57
    %p60 = scmp.ne.s32.totalorder %s43, %s59
    %p61 = scmp.eq.s32.totalorder %s21, 0
    %p62 = por %p60, %p61
    %s64 = sadd.s32 %s63, 1
    %p67 = scmp.eq.s32.totalorder %s15, 1
    %p68 = scmp.ne.s32.totalorder %s63, %s65
    %p69 = scmp.eq.s32.totalorder %s15, 0
    %p70 = por %p68, %p69
    %p71 = scmp.ne.s32.totalorder %s63, %s65
    %p72 = scmp.eq.s32.totalorder %s20, 1
    %p73 = por %p71, %p72
    %p74 = scmp.ne.s32.totalorder %s65, %s66
    %p75 = scmp.eq.s32.totalorder %s20, 0
    %p76 = por %p74, %p75
    %p77 = scmp.ne.s32.totalorder %s65, %s66
    %p78 = scmp.eq.s32.totalorder %s21, 1
    %p79 = por %p77, %p78
    %p81 = scmp.ne.s32.totalorder %s66, %s80
    %p82 = scmp.eq.s32.totalorder %s21, 0
    %p83 = por %p81, %p82
    %s85 = sadd.s32 %s84, 1
    %p88 = scmp.eq.s32.totalorder %s15, 1
    %p89 = scmp.ne.s32.totalorder %s84, %s86
    %p90 = scmp.eq.s32.totalorder %s15, 0
    %p91 = por %p89, %p90
    %p92 = scmp.ne.s32.totalorder %s84, %s86
    %p93 = scmp.eq.s32.totalorder %s20, 1
    %p94 = por %p92, %p93
    %p95 = scmp.ne.s32.totalorder %s86, %s87
    %p96 = scmp.eq.s32.totalorder %s20, 0
    %p97 = por %p95, %p96
    %p98 = scmp.ne.s32.totalorder %s86, %s87
    %p99 = scmp.eq.s32.totalorder %s21, 1
    %p100 = por %p98, %p99
    %p102 = scmp.ne.s32.totalorder %s87, %s101
    %p103 = scmp.eq.s32.totalorder %s21, 0
    %p104 = por %p102, %p103
    %s106 = sadd.s32 %s105, 1
    %p109 = scmp.eq.s32.totalorder %s15, 1
    %p110 = scmp.ne.s32.totalorder %s105, %s107
    %p111 = scmp.eq.s32.totalorder %s15, 0
    %p112 = por %p110, %p111
    %p113 = scmp.ne.s32.totalorder %s105, %s107
    %p114 = scmp.eq.s32.totalorder %s20, 1
    %p115 = por %p113, %p114
    %p116 = scmp.ne.s32.totalorder %s107, %s108
    %p117 = scmp.eq.s32.totalorder %s20, 0
    %p118 = por %p116, %p117
    %p119 = scmp.ne.s32.totalorder %s107, %s108
    %p120 = scmp.eq.s32.totalorder %s21, 1
    %p121 = por %p119, %p120
    %p123 = scmp.ne.s32.totalorder %s108, %s122
    %p124 = scmp.eq.s32.totalorder %s21, 0
    %p125 = por %p123, %p124
    %s127 = sadd.s32 %s126, 1
    %p130 = scmp.eq.s32.totalorder %s15, 1
    %p131 = scmp.ne.s32.totalorder %s126, %s128
    %p132 = scmp.eq.s32.totalorder %s15, 0
    %p133 = por %p131, %p132
    %p134 = scmp.ne.s32.totalorder %s126, %s128
    %p135 = scmp.eq.s32.totalorder %s20, 1
    %p136 = por %p134, %p135
    %p137 = scmp.ne.s32.totalorder %s128, %s129
    %p138 = scmp.eq.s32.totalorder %s20, 0
    %p139 = por %p137, %p138
    %p140 = scmp.ne.s32.totalorder %s128, %s129
    %p141 = scmp.eq.s32.totalorder %s21, 1
    %p142 = por %p140, %p141
    %p144 = scmp.ne.s32.totalorder %s129, %s143
    %p145 = scmp.eq.s32.totalorder %s21, 0
    %p146 = por %p144, %p145
    %s148 = sadd.s32 %s147, 1
    %p151 = scmp.eq.s32.totalorder %s15, 1
    %p152 = scmp.ne.s32.totalorder %s147, %s149
    %p153 = scmp.eq.s32.totalorder %s15, 0
    %p154 = por %p152, %p153
    %p155 = scmp.ne.s32.totalorder %s147, %s149
    %p156 = scmp.eq.s32.totalorder %s20, 1
    %p157 = por %p155, %p156
    %p158 = scmp.ne.s32.totalorder %s149, %s150
    %p159 = scmp.eq.s32.totalorder %s20, 0
    %p160 = por %p158, %p159
    %p161 = scmp.ne.s32.totalorder %s149, %s150
    %p162 = scmp.eq.s32.totalorder %s21, 1
    %p163 = por %p161, %p162
    %p165 = scmp.ne.s32.totalorder %s150, %s164
    %p166 = scmp.eq.s32.totalorder %s21, 0
    %p167 = por %p165, %p166
    %s169 = sadd.s32 %s168, 1
    %p172 = scmp.eq.s32.totalorder %s15, 1
    %p173 = scmp.ne.s32.totalorder %s168, %s170
    %p174 = scmp.eq.s32.totalorder %s15, 0
    %p175 = por %p173, %p174
    %p176 = scmp.ne.s32.totalorder %s168, %s170
    %p177 = scmp.eq.s32.totalorder %s20, 1
    %p178 = por %p176, %p177
    %p179 = scmp.ne.s32.totalorder %s170, %s171
    %p180 = scmp.eq.s32.totalorder %s20, 0
    %p181 = por %p179, %p180
    %p182 = scmp.ne.s32.totalorder %s170, %s171
    %p183 = scmp.eq.s32.totalorder %s21, 1
    %p184 = por %p182, %p183
    %p186 = scmp.ne.s32.totalorder %s171, %s185
    %p187 = scmp.eq.s32.totalorder %s21, 0
    %p188 = por %p186, %p187
    %s189 = ssub.s32 %s22, %s34
    %s190 = ssub.s32 %s23, %s30
    %s191 = sor.u32 %s189, %s190
    %p192 = scmp.eq.s32.totalorder %s191, 0
    %s194 = sadd.s32 %s193, 1
    %s195 = scalar_select %p192, %s193, %s194
    %p198 = pneg %p192
    %p199 = scmp.eq.s32.totalorder %s15, 1
    %p200 = por %p198, %p199
    %p201 = scmp.ne.s32.totalorder %s193, %s196
    %p202 = scmp.eq.s32.totalorder %s15, 0
    %p203 = por %p201, %p202
    %p204 = scmp.ne.s32.totalorder %s193, %s196
    %p205 = scmp.eq.s32.totalorder %s20, 1
    %p206 = por %p204, %p205
    %p207 = scmp.ne.s32.totalorder %s196, %s197
    %p208 = scmp.eq.s32.totalorder %s20, 0
    %p209 = por %p207, %p208
    %p210 = scmp.ne.s32.totalorder %s196, %s197
    %p211 = scmp.eq.s32.totalorder %s21, 1
    %p212 = por %p210, %p211
    %p214 = scmp.ne.s32.totalorder %s197, %s213
    %p215 = scmp.eq.s32.totalorder %s21, 0
    %p216 = por %p214, %p215
    %p217 = scmp.le.s32.totalorder 1, %s15
    %p218 = scmp.lt.s32.totalorder %s15, 3
    %p219 = pnand %p217, %p218
    %p220 = pneg %p219
    // Predicated region
    $region9: #{pmask_net_forward.3} parent=5 // pred_check
      _
    $region10: #{pmask_net_forward.3} parent=5 // pred_check_branch
      %222 = sbr.rel (%p219) target = $region12
    $region11: #{pmask_net_forward.3} parent=5 // pred_region
      %s223 = ssub.s32 %s15, 1
      // Predicated region
      $region13: #{pmask_net_forward.3} parent=11 // pred_check
        %p224 = pneg %p76
      $region14: #{pmask_net_forward.3} parent=11 // pred_check_branch
        %226 = sbr.rel (%p224) target = $region16
      $region15: #{pmask_net_forward.3} parent=11 // pred_region
        _
      $region16: #{pmask_net_forward.3} parent=11 // pred_fallthru
        _
      // Predicated region
      $region17: #{pmask_net_forward.3} parent=11 // pred_check
        %p227 = pneg %p97
      $region18: #{pmask_net_forward.3} parent=11 // pred_check_branch
        %229 = sbr.rel (%p227) target = $region20
      $region19: #{pmask_net_forward.3} parent=11 // pred_region
        _
      $region20: #{pmask_net_forward.3} parent=11 // pred_fallthru
        _
      // Predicated region
      $region21: #{pmask_net_forward.3} parent=11 // pred_check
        %p230 = pneg %p118
      $region22: #{pmask_net_forward.3} parent=11 // pred_check_branch
        %232 = sbr.rel (%p230) target = $region24
      $region23: #{pmask_net_forward.3} parent=11 // pred_region
        _
      $region24: #{pmask_net_forward.3} parent=11 // pred_fallthru
        _
      // Predicated region
      $region25: #{pmask_net_forward.3} parent=11 // pred_check
        %p233 = pneg %p139
      $region26: #{pmask_net_forward.3} parent=11 // pred_check_branch
        %235 = sbr.rel (%p233) target = $region28
      $region27: #{pmask_net_forward.3} parent=11 // pred_region
        _
      $region28: #{pmask_net_forward.3} parent=11 // pred_fallthru
        _
      // Predicated region
      $region29: #{pmask_net_forward.3} parent=11 // pred_check
        %p236 = pneg %p160
      $region30: #{pmask_net_forward.3} parent=11 // pred_check_branch
        %238 = sbr.rel (%p236) target = $region32
      $region31: #{pmask_net_forward.3} parent=11 // pred_region
        _
      $region32: #{pmask_net_forward.3} parent=11 // pred_fallthru
        _
      // Predicated region
      $region33: #{pmask_net_forward.3} parent=11 // pred_check
        %p239 = pneg %p181
      $region34: #{pmask_net_forward.3} parent=11 // pred_check_branch
        %241 = sbr.rel (%p239) target = $region36
      $region35: #{pmask_net_forward.3} parent=11 // pred_region
        _
      $region36: #{pmask_net_forward.3} parent=11 // pred_fallthru
        _
    $region12: #{pmask_net_forward.3} parent=5 // pred_fallthru
      _
    %p242 = scmp.lt.s32.totalorder %s15, 2
    // Predicated region
    $region37: #{pmask_net_forward.3} parent=5 // pred_check
      %p243 = pneg %p242
    $region38: #{pmask_net_forward.3} parent=5 // pred_check_branch
      %245 = sbr.rel (%p243) target = $region40
    $region39: #{pmask_net_forward.3} parent=5 // pred_region
      // Predicated region
      $region41: #{pmask_net_forward.3} parent=39 // pred_check
        %p246 = pneg %p49
      $region42: #{pmask_net_forward.3} parent=39 // pred_check_branch
        %248 = sbr.rel (%p246) target = $region44
      $region43: #{pmask_net_forward.3} parent=39 // pred_region
        %s249 = smul.u32 16, %s23
        %p250 = scmp.lt.s32.totalorder %s22, 1
        %s251 = scalar_select %p250, %s22, 1
        %p252 = scmp.lt.s32.totalorder %s249, 15
        %s253 = scalar_select %p252, %s249, 15
        %s254 = smul.addr %s253, 2
        %s255 = smul.addr %s251, 32
        %s256 = sadd.s32 %s254, %s255
        %s257 = smul.addr %s256, 8
        %s258 = scalar_lea.vmem %s0, %s257
        %s259 = smul.u32 16, %s23
      $region44: #{pmask_net_forward.3} parent=39 // pred_fallthru
        _
    $region40: #{pmask_net_forward.3} parent=5 // pred_fallthru
      _
    %p260 = scmp.le.s32.totalorder 1, %s15
    %p261 = scmp.lt.s32.totalorder %s15, 3
    %p262 = pnand %p260, %p261
    %p263 = pneg %p262
    // Predicated region
    $region45: #{pmask_net_forward.3} parent=5 // pred_check
      _
    $region46: #{pmask_net_forward.3} parent=5 // pred_check_branch
      %265 = sbr.rel (%p262) target = $region48
    $region47: #{pmask_net_forward.3} parent=5 // pred_region
      %s266 = ssub.s32 %s15, 1
      %s267 = smul.u32 16, %s25
      %p268 = scmp.lt.s32.totalorder %s24, 1
      %s269 = scalar_select %p268, %s24, 1
      %p270 = scmp.lt.s32.totalorder %s267, 15
      %s271 = scalar_select %p270, %s267, 15
      %s272 = smul.addr %s271, 2
      %s273 = smul.addr %s269, 32
      %s274 = sadd.s32 %s272, %s273
      %s275 = smul.addr %s274, 8
      %s276 = scalar_lea.vmem %s0, %s275
      %p277 = pneg %p55
      %p278 = pneg %p52
      %p279 = pneg %p76
      %p280 = pneg %p73
      %p281 = pneg %p97
      %p282 = pneg %p94
      %p283 = pneg %p118
      %p284 = pneg %p115
      %p285 = pneg %p139
      %p286 = pneg %p136
      %p287 = pneg %p160
      %p288 = pneg %p157
      %p289 = pneg %p181
      %p290 = pneg %p178
      %p291 = pneg %p209
      %p292 = pneg %p206
      %p293 = scmp.lt.s32.totalorder %s24, 1
      %s294 = scalar_select %p293, %s24, 1
      %p295 = scmp.lt.s32.totalorder %s25, 0
      %s296 = scalar_select %p295, %s25, 0
      %s297 = sadd.s32 %s296, %s294
      %s298 = scalar_lea.vmem %s7, %s297
      %s299 = smul.u32 16, %s25
      %p300 = scmp.lt.s32.totalorder %s24, 1
      %s301 = scalar_select %p300, %s24, 1
      %p302 = scmp.lt.s32.totalorder %s299, 15
      %s303 = scalar_select %p302, %s299, 15
      %s304 = smul.addr %s303, 2
      %s305 = smul.addr %s301, 32
      %s306 = sadd.s32 %s304, %s305
      %s307 = smul.addr %s306, 8
      %s308 = scalar_lea.vmem %s0, %s307
      %s309 = smul.u32 16, %s25
      %p310 = scmp.lt.s32.totalorder %s24, 1
      %s311 = scalar_select %p310, %s24, 1
      %p312 = scmp.lt.s32.totalorder %s25, 0
      %s313 = scalar_select %p312, %s25, 0
      %s314 = sadd.s32 %s313, %s311
      %s315 = scalar_lea.vmem %s7, %s314
      %v316 = vld [vmem:[%s308] sm:$0xff]
      %v317 = vld [vmem:[%s308 + $0x8] sm:$0xff]
      %v318 = vld [vmem:[%s308 + $0x10] sm:$0xff]
      %v319 = vld [vmem:[%s308 + $0x18] sm:$0xff]
      %v320 = vld [vmem:[%s308 + $0x20] sm:$0xff]
      %v321 = vld [vmem:[%s308 + $0x28] sm:$0xff]
      %v322 = vld [vmem:[%s308 + $0x30] sm:$0xff]
      %v323 = vld [vmem:[%s308 + $0x38] sm:$0xff]
      %v324 = vld [vmem:[%s308 + $0x40] sm:$0xff]
      %v325 = vld [vmem:[%s308 + $0x48] sm:$0xff]
      %v326 = vld [vmem:[%s308 + $0x50] sm:$0xff]
      %v327 = vld [vmem:[%s308 + $0x58] sm:$0xff]
      %v328 = vld [vmem:[%s308 + $0x60] sm:$0xff]
      %v329 = vld [vmem:[%s308 + $0x68] sm:$0xff]
      %v330 = vld [vmem:[%s308 + $0x70] sm:$0xff]
      %v331 = vld [vmem:[%s308 + $0x78] sm:$0xff]
      %v332 = vld [vmem:[%s308 + $0x80] sm:$0xff]
      %v333 = vld [vmem:[%s308 + $0x88] sm:$0xff]
      %v334 = vld [vmem:[%s308 + $0x90] sm:$0xff]
      %v335 = vld [vmem:[%s308 + $0x98] sm:$0xff]
      %v336 = vld [vmem:[%s308 + $0xa0] sm:$0xff]
      %v337 = vld [vmem:[%s308 + $0xa8] sm:$0xff]
      %v338 = vld [vmem:[%s308 + $0xb0] sm:$0xff]
      %v339 = vld [vmem:[%s308 + $0xb8] sm:$0xff]
      %v340 = vld [vmem:[%s308 + $0xc0] sm:$0xff]
      %v341 = vld [vmem:[%s308 + $0xc8] sm:$0xff]
      %v342 = vld [vmem:[%s308 + $0xd0] sm:$0xff]
      %v343 = vld [vmem:[%s308 + $0xd8] sm:$0xff]
      %v344 = vld [vmem:[%s308 + $0xe0] sm:$0xff]
      %v345 = vld [vmem:[%s308 + $0xe8] sm:$0xff]
      %v346 = vld [vmem:[%s308 + $0xf0] sm:$0xff]
      %v347 = vld [vmem:[%s308 + $0xf8] sm:$0xff]
      %v348 = vld [vmem:[%s1] sm:$0xff]
      %v349 = vld [vmem:[%s1 + $0x8] sm:$0xff]
      %v350 = vld [vmem:[%s1 + $0x10] sm:$0xff]
      %v351 = vld [vmem:[%s1 + $0x18] sm:$0xff]
      %v352 = vld [vmem:[%s1 + $0x20] sm:$0xff]
      %v353 = vld [vmem:[%s1 + $0x28] sm:$0xff]
      %v354 = vld [vmem:[%s1 + $0x30] sm:$0xff]
      %v355 = vld [vmem:[%s1 + $0x38] sm:$0xff]
      %v356 = vld [vmem:[%s1 + $0x40] sm:$0xff]
      %v357 = vld [vmem:[%s1 + $0x48] sm:$0xff]
      %v358 = vld [vmem:[%s1 + $0x50] sm:$0xff]
      %v359 = vld [vmem:[%s1 + $0x58] sm:$0xff]
      %v360 = vld [vmem:[%s1 + $0x60] sm:$0xff]
      %v361 = vld [vmem:[%s1 + $0x68] sm:$0xff]
      %v362 = vld [vmem:[%s1 + $0x70] sm:$0xff]
      %v363 = vld [vmem:[%s1 + $0x78] sm:$0xff]
      %v364 = vld [vmem:[%s1 + $0x80] sm:$0x7f]
      %v365 = vld [vmem:[%s2] sm:$0x1]
      %v367 = vlaneseq
      %v368 = vshrl.u32 %v367, 7
      %v369 = vsub.s32 0, %v368
      %v370 = vrot.slane %v365, %v369
      %vm372 = vcmask 56320
      %v374 = vsel %vm372, %v317, 0
      %v377 = vsel %vm372, %v319, 0
      %v380 = vsel %vm372, %v321, 0
      %v383 = vsel %vm372, %v323, 0
      %v386 = vsel %vm372, %v325, 0
      %v389 = vsel %vm372, %v327, 0
      %v392 = vsel %vm372, %v329, 0
      %v395 = vsel %vm372, %v331, 0
      %v398 = vsel %vm372, %v333, 0
      %v401 = vsel %vm372, %v335, 0
      %v404 = vsel %vm372, %v337, 0
      %v407 = vsel %vm372, %v339, 0
      %v410 = vsel %vm372, %v341, 0
      %v413 = vsel %vm372, %v343, 0
      %v416 = vsel %vm372, %v345, 0
      %v419 = vsel %vm372, %v347, 0
      %vm421 = vcmask 1046528
      %v423 = vsel %vm421, %v364, 0
      %425 = vmatprep.subr.mxu0 0.0
      %426 = vmatpush1.msra.mxu0 %v348
      %427 = vmatprep.subr.mxu0 0.0
      %428 = vmatpush1.msra.mxu0 %v349
      %429 = vmatprep.subr.mxu0 0.0
      %430 = vmatpush1.msra.mxu0 %v350
      %431 = vmatprep.subr.mxu0 0.0
      %432 = vmatpush1.msra.mxu0 %v351
      %433 = vmatprep.subr.mxu0 0.0
      %434 = vmatpush1.msra.mxu0 %v352
      %435 = vmatprep.subr.mxu0 0.0
      %436 = vmatpush1.msra.mxu0 %v353
      %437 = vmatprep.subr.mxu0 0.0
      %438 = vmatpush1.msra.mxu0 %v354
      %439 = vmatprep.subr.mxu0 0.0
      %440 = vmatpush1.msra.mxu0 %v355
      %441 = vmatprep.subr.mxu0 0.0
      %442 = vmatpush1.msra.mxu0 %v356
      %443 = vmatprep.subr.mxu0 0.0
      %444 = vmatpush1.msra.mxu0 %v357
      %445 = vmatprep.subr.mxu0 0.0
      %446 = vmatpush1.msra.mxu0 %v358
      %447 = vmatprep.subr.mxu0 0.0
      %448 = vmatpush1.msra.mxu0 %v359
      %449 = vmatprep.subr.mxu0 0.0
      %450 = vmatpush1.msra.mxu0 %v360
      %451 = vmatprep.subr.mxu0 0.0
      %452 = vmatpush1.msra.mxu0 %v361
      %453 = vmatprep.subr.mxu0 0.0
      %454 = vmatpush1.msra.mxu0 %v362
      %455 = vmatprep.subr.mxu0 0.0
      %456 = vmatpush1.msra.mxu0 %v363
      %457 = vmatprep.subr.mxu0 0.0
      %458 = vmatpush1.msra.mxu0 %v423
      %459 = vmatprep.subr.mxu0 0.0
      %460 = vmatpush1.msra.mxu0 0.0
      %461 = vmatprep.subr.mxu0 0.0
      %462 = vmatpush1.msra.mxu0 0.0
      %463 = vmatprep.subr.mxu0 0.0
      %464 = vmatpush1.msra.mxu0 0.0
      %465 = vmatprep.subr.mxu0 0.0
      %466 = vmatpush1.msra.mxu0 0.0
      %467 = vmatprep.subr.mxu0 0.0
      %468 = vmatpush1.msra.mxu0 0.0
      %469 = vmatprep.subr.mxu0 0.0
      %470 = vmatpush1.msra.mxu0 0.0
      %471 = vmatprep.subr.mxu0 0.0
      %472 = vmatpush1.msra.mxu0 0.0
      %473 = vmatprep.subr.mxu0 0.0
      %474 = vmatpush1.msra.mxu0 0.0
      %475 = vmatprep.subr.mxu0 0.0
      %476 = vmatpush1.msra.mxu0 0.0
      %477 = vmatprep.subr.mxu0 0.0
      %478 = vmatpush1.msra.mxu0 0.0
      %479 = vmatprep.subr.mxu0 0.0
      %480 = vmatpush1.msra.mxu0 0.0
      %481 = vmatprep.subr.mxu0 0.0
      %482 = vmatpush1.msra.mxu0 0.0
      %483 = vmatprep.subr.mxu0 0.0
      %484 = vmatpush1.msra.mxu0 0.0
      %485 = vmatprep.subr.mxu0 0.0
      %486 = vmatpush1.msra.mxu0 0.0
      %487 = vmatprep.subr.mxu0 0.0
      %488 = vmatpush1.msra.mxu0 0.0
      %489 = vmatprep.mubr.f32.mxu0 %v374
      %490 = vmatmul.mubr.f32.gmra.mrb[0].mxu0 %v316
      %v491 = vpop.f32.mrb[0].mxu0
      %v492 = vadd.f32 %v370, %v491
      %v493 = vpop.f32.mrb[0].mxu0
      %494 = vmatprep.mubr.f32.mxu0 %v377
      %495 = vmatmul.mubr.f32.gmra.mrb[0].mxu0 %v318
      %v496 = vpop.f32.mrb[0].mxu0
      %v497 = vadd.f32 %v370, %v496
      %v498 = vpop.f32.mrb[0].mxu0
      %499 = vmatprep.mubr.f32.mxu0 %v380
      %500 = vmatmul.mubr.f32.gmra.mrb[0].mxu0 %v320
      %v501 = vpop.f32.mrb[0].mxu0
      %v502 = vadd.f32 %v370, %v501
      %v503 = vpop.f32.mrb[0].mxu0
      %504 = vmatprep.mubr.f32.mxu0 %v383
      %505 = vmatmul.mubr.f32.gmra.mrb[0].mxu0 %v322
      %v506 = vpop.f32.mrb[0].mxu0
      %v507 = vadd.f32 %v370, %v506
      %v508 = vpop.f32.mrb[0].mxu0
      %509 = vmatprep.mubr.f32.mxu0 %v386
      %510 = vmatmul.mubr.f32.gmra.mrb[0].mxu0 %v324
      %v511 = vpop.f32.mrb[0].mxu0
      %v512 = vadd.f32 %v370, %v511
      %v513 = vpop.f32.mrb[0].mxu0
      %514 = vmatprep.mubr.f32.mxu0 %v389
      %515 = vmatmul.mubr.f32.gmra.mrb[0].mxu0 %v326
      %v516 = vpop.f32.mrb[0].mxu0
      %v517 = vadd.f32 %v370, %v516
      %v518 = vpop.f32.mrb[0].mxu0
      %519 = vmatprep.mubr.f32.mxu0 %v392
      %520 = vmatmul.mubr.f32.gmra.mrb[0].mxu0 %v328
      %v521 = vpop.f32.mrb[0].mxu0
      %v522 = vadd.f32 %v370, %v521
      %v523 = vpop.f32.mrb[0].mxu0
      %524 = vmatprep.mubr.f32.mxu0 %v395
      %525 = vmatmul.mubr.f32.gmra.mrb[0].mxu0 %v330
      %v526 = vpop.f32.mrb[0].mxu0
      %v527 = vadd.f32 %v370, %v526
      %v528 = vpop.f32.mrb[0].mxu0
      %529 = vmatprep.mubr.f32.mxu0 %v398
      %530 = vmatmul.mubr.f32.gmra.mrb[0].mxu0 %v332
      %v531 = vpop.f32.mrb[0].mxu0
      %v532 = vadd.f32 %v370, %v531
      %v533 = vpop.f32.mrb[0].mxu0
      %534 = vmatprep.mubr.f32.mxu0 %v401
      %535 = vmatmul.mubr.f32.gmra.mrb[0].mxu0 %v334
      %v536 = vpop.f32.mrb[0].mxu0
      %v537 = vadd.f32 %v370, %v536
      %v538 = vpop.f32.mrb[0].mxu0
      %539 = vmatprep.mubr.f32.mxu0 %v404
      %540 = vmatmul.mubr.f32.gmra.mrb[0].mxu0 %v336
      %v541 = vpop.f32.mrb[0].mxu0
      %v542 = vadd.f32 %v370, %v541
      %v543 = vpop.f32.mrb[0].mxu0
      %544 = vmatprep.mubr.f32.mxu0 %v407
      %545 = vmatmul.mubr.f32.gmra.mrb[0].mxu0 %v338
      %v546 = vpop.f32.mrb[0].mxu0
      %v547 = vadd.f32 %v370, %v546
      %v548 = vpop.f32.mrb[0].mxu0
      %549 = vmatprep.mubr.f32.mxu0 %v410
      %550 = vmatmul.mubr.f32.gmra.mrb[0].mxu0 %v340
      %v551 = vpop.f32.mrb[0].mxu0
      %v552 = vadd.f32 %v370, %v551
      %v553 = vpop.f32.mrb[0].mxu0
      %554 = vmatprep.mubr.f32.mxu0 %v413
      %555 = vmatmul.mubr.f32.gmra.mrb[0].mxu0 %v342
      %v556 = vpop.f32.mrb[0].mxu0
      %v557 = vadd.f32 %v370, %v556
      %v558 = vpop.f32.mrb[0].mxu0
      %559 = vmatprep.mubr.f32.mxu0 %v416
      %560 = vmatmul.mubr.f32.gmra.mrb[0].mxu0 %v344
      %v561 = vpop.f32.mrb[0].mxu0
      %v562 = vadd.f32 %v370, %v561
      %v563 = vpop.f32.mrb[0].mxu0
      %564 = vmatprep.mubr.f32.mxu0 %v419
      %565 = vmatmul.mubr.f32.gmra.mrb[0].mxu0 %v346
      %v566 = vpop.f32.mrb[0].mxu0
      %v567 = vadd.f32 %v370, %v566
      %v568 = vpop.f32.mrb[0].mxu0
      %569 = vdwg.mxu0
      %vm570 = vcmp.ge.f32.partialorder %v492, 0.0
      %vm571 = vcmp.ge.f32.partialorder %v497, 0.0
      %vm572 = vcmp.ge.f32.partialorder %v502, 0.0
      %vm573 = vcmp.ge.f32.partialorder %v507, 0.0
      %vm574 = vcmp.ge.f32.partialorder %v512, 0.0
      %vm575 = vcmp.ge.f32.partialorder %v517, 0.0
      %vm576 = vcmp.ge.f32.partialorder %v522, 0.0
      %vm577 = vcmp.ge.f32.partialorder %v527, 0.0
      %vm578 = vcmp.ge.f32.partialorder %v532, 0.0
      %vm579 = vcmp.ge.f32.partialorder %v537, 0.0
      %vm580 = vcmp.ge.f32.partialorder %v542, 0.0
      %vm581 = vcmp.ge.f32.partialorder %v547, 0.0
      %vm582 = vcmp.ge.f32.partialorder %v552, 0.0
      %vm583 = vcmp.ge.f32.partialorder %v557, 0.0
      %vm584 = vcmp.ge.f32.partialorder %v562, 0.0
      %vm585 = vcmp.ge.f32.partialorder %v567, 0.0
      %v586 = vmul.f32 %v492, 0.01
      %v587 = vmul.f32 %v497, 0.01
      %v588 = vmul.f32 %v502, 0.01
      %v589 = vmul.f32 %v507, 0.01
      %v590 = vmul.f32 %v512, 0.01
      %v591 = vmul.f32 %v517, 0.01
      %v592 = vmul.f32 %v522, 0.01
      %v593 = vmul.f32 %v527, 0.01
      %v594 = vmul.f32 %v532, 0.01
      %v595 = vmul.f32 %v537, 0.01
      %v596 = vmul.f32 %v542, 0.01
      %v597 = vmul.f32 %v547, 0.01
      %v598 = vmul.f32 %v552, 0.01
      %v599 = vmul.f32 %v557, 0.01
      %v600 = vmul.f32 %v562, 0.01
      %v601 = vmul.f32 %v567, 0.01
      %v602 = vsel %vm570, %v492, %v586
      %v603 = vsel %vm571, %v497, %v587
      %v604 = vsel %vm572, %v502, %v588
      %v605 = vsel %vm573, %v507, %v589
      %v606 = vsel %vm574, %v512, %v590
      %v607 = vsel %vm575, %v517, %v591
      %v608 = vsel %vm576, %v522, %v592
      %v609 = vsel %vm577, %v527, %v593
      %v610 = vsel %vm578, %v532, %v594
      %v611 = vsel %vm579, %v537, %v595
      %v612 = vsel %vm580, %v542, %v596
      %v613 = vsel %vm581, %v547, %v597
      %v614 = vsel %vm582, %v552, %v598
      %v615 = vsel %vm583, %v557, %v599
      %v616 = vsel %vm584, %v562, %v600
      %v617 = vsel %vm585, %v567, %v601
      %v618 = vld [vmem:[%s3] sm:$0xff]
      %v619 = vld [vmem:[%s3 + $0x8] sm:$0xff]
      %v620 = vld [vmem:[%s3 + $0x10] sm:$0xff]
      %v621 = vld [vmem:[%s3 + $0x18] sm:$0xff]
      %v622 = vld [vmem:[%s3 + $0x20] sm:$0xff]
      %v623 = vld [vmem:[%s3 + $0x28] sm:$0xff]
      %v624 = vld [vmem:[%s3 + $0x30] sm:$0xff]
      %v625 = vld [vmem:[%s3 + $0x38] sm:$0xff]
      %v626 = vld [vmem:[%s4] sm:$0x1]
      %v628 = vlaneseq
      %v629 = vshrl.u32 %v628, 7
      %v630 = vsub.s32 0, %v629
      %v631 = vrot.slane %v626, %v630
      %vm633 = vcmask 523264
      %v635 = vsel %vm633, %v602, 0
      %v638 = vsel %vm633, %v603, 0
      %v641 = vsel %vm633, %v604, 0
      %v644 = vsel %vm633, %v605, 0
      %v647 = vsel %vm633, %v606, 0
      %v650 = vsel %vm633, %v607, 0
      %v653 = vsel %vm633, %v608, 0
      %v656 = vsel %vm633, %v609, 0
      %v659 = vsel %vm633, %v610, 0
      %v662 = vsel %vm633, %v611, 0
      %v665 = vsel %vm633, %v612, 0
      %v668 = vsel %vm633, %v613, 0
      %v671 = vsel %vm633, %v614, 0
      %v674 = vsel %vm633, %v615, 0
      %v677 = vsel %vm633, %v616, 0
      %v680 = vsel %vm633, %v617, 0
      %682 = vmatprep.subr.mxu0 0.0
      %683 = vmatpush1.msra.mxu0 %v618
      %684 = vmatprep.subr.mxu0 0.0
      %685 = vmatpush1.msra.mxu0 %v619
      %686 = vmatprep.subr.mxu0 0.0
      %687 = vmatpush1.msra.mxu0 %v620
      %688 = vmatprep.subr.mxu0 0.0
      %689 = vmatpush1.msra.mxu0 %v621
      %690 = vmatprep.subr.mxu0 0.0
      %691 = vmatpush1.msra.mxu0 %v622
      %692 = vmatprep.subr.mxu0 0.0
      %693 = vmatpush1.msra.mxu0 %v623
      %694 = vmatprep.subr.mxu0 0.0
      %695 = vmatpush1.msra.mxu0 %v624
      %696 = vmatprep.subr.mxu0 0.0
      %697 = vmatpush1.msra.mxu0 %v625
      %698 = vmatprep.subr.mxu0 0.0
      %699 = vmatpush1.msra.mxu0 0.0
      %700 = vmatprep.subr.mxu0 0.0
      %701 = vmatpush1.msra.mxu0 0.0
      %702 = vmatprep.subr.mxu0 0.0
      %703 = vmatpush1.msra.mxu0 0.0
      %704 = vmatprep.subr.mxu0 0.0
      %705 = vmatpush1.msra.mxu0 0.0
      %706 = vmatprep.subr.mxu0 0.0
      %707 = vmatpush1.msra.mxu0 0.0
      %708 = vmatprep.subr.mxu0 0.0
      %709 = vmatpush1.msra.mxu0 0.0
      %710 = vmatprep.subr.mxu0 0.0
      %711 = vmatpush1.msra.mxu0 0.0
      %712 = vmatprep.subr.mxu0 0.0
      %713 = vmatpush1.msra.mxu0 0.0
      %714 = vmatprep.subr.mxu0 0.0
      %715 = vmatpush1.msra.mxu0 0.0
      %716 = vmatprep.subr.mxu0 0.0
      %717 = vmatpush1.msra.mxu0 0.0
      %718 = vmatprep.subr.mxu0 0.0
      %719 = vmatpush1.msra.mxu0 0.0
      %720 = vmatprep.subr.mxu0 0.0
      %721 = vmatpush1.msra.mxu0 0.0
      %722 = vmatprep.subr.mxu0 0.0
      %723 = vmatpush1.msra.mxu0 0.0
      %724 = vmatprep.subr.mxu0 0.0
      %725 = vmatpush1.msra.mxu0 0.0
      %726 = vmatprep.subr.mxu0 0.0
      %727 = vmatpush1.msra.mxu0 0.0
      %728 = vmatprep.subr.mxu0 0.0
      %729 = vmatpush1.msra.mxu0 0.0
      %730 = vmatprep.subr.mxu0 0.0
      %731 = vmatpush1.msra.mxu0 0.0
      %732 = vmatprep.subr.mxu0 0.0
      %733 = vmatpush1.msra.mxu0 0.0
      %734 = vmatprep.subr.mxu0 0.0
      %735 = vmatpush1.msra.mxu0 0.0
      %736 = vmatprep.subr.mxu0 0.0
      %737 = vmatpush1.msra.mxu0 0.0
      %738 = vmatprep.subr.mxu0 0.0
      %739 = vmatpush1.msra.mxu0 0.0
      %740 = vmatprep.subr.mxu0 0.0
      %741 = vmatpush1.msra.mxu0 0.0
      %742 = vmatprep.subr.mxu0 0.0
      %743 = vmatpush1.msra.mxu0 0.0
      %744 = vmatprep.subr.mxu0 0.0
      %745 = vmatpush1.msra.mxu0 0.0
      %746 = vmatprep.mubr.f32.mxu0 0.0
      %747 = vmatmul.mubr.f32.gmra.mrb[0].mxu0 %v635
      %v748 = vpop.f32.mrb[0].mxu0
      %v749 = vadd.f32 %v631, %v748
      %v750 = vpop.f32.mrb[0].mxu0
      %751 = vmatprep.mubr.f32.mxu0 0.0
      %752 = vmatmul.mubr.f32.gmra.mrb[0].mxu0 %v638
      %v753 = vpop.f32.mrb[0].mxu0
      %v754 = vadd.f32 %v631, %v753
      %v755 = vpop.f32.mrb[0].mxu0
      %756 = vmatprep.mubr.f32.mxu0 0.0
      %757 = vmatmul.mubr.f32.gmra.mrb[0].mxu0 %v641
      %v758 = vpop.f32.mrb[0].mxu0
      %v759 = vadd.f32 %v631, %v758
      %v760 = vpop.f32.mrb[0].mxu0
      %761 = vmatprep.mubr.f32.mxu0 0.0
      %762 = vmatmul.mubr.f32.gmra.mrb[0].mxu0 %v644
      %v763 = vpop.f32.mrb[0].mxu0
      %v764 = vadd.f32 %v631, %v763
      %v765 = vpop.f32.mrb[0].mxu0
      %766 = vmatprep.mubr.f32.mxu0 0.0
      %767 = vmatmul.mubr.f32.gmra.mrb[0].mxu0 %v647
      %v768 = vpop.f32.mrb[0].mxu0
      %v769 = vadd.f32 %v631, %v768
      %v770 = vpop.f32.mrb[0].mxu0
      %771 = vmatprep.mubr.f32.mxu0 0.0
      %772 = vmatmul.mubr.f32.gmra.mrb[0].mxu0 %v650
      %v773 = vpop.f32.mrb[0].mxu0
      %v774 = vadd.f32 %v631, %v773
      %v775 = vpop.f32.mrb[0].mxu0
      %776 = vmatprep.mubr.f32.mxu0 0.0
      %777 = vmatmul.mubr.f32.gmra.mrb[0].mxu0 %v653
      %v778 = vpop.f32.mrb[0].mxu0
      %v779 = vadd.f32 %v631, %v778
      %v780 = vpop.f32.mrb[0].mxu0
      %781 = vmatprep.mubr.f32.mxu0 0.0
      %782 = vmatmul.mubr.f32.gmra.mrb[0].mxu0 %v656
      %v783 = vpop.f32.mrb[0].mxu0
      %v784 = vadd.f32 %v631, %v783
      %v785 = vpop.f32.mrb[0].mxu0
      %786 = vmatprep.mubr.f32.mxu0 0.0
      %787 = vmatmul.mubr.f32.gmra.mrb[0].mxu0 %v659
      %v788 = vpop.f32.mrb[0].mxu0
      %v789 = vadd.f32 %v631, %v788
      %v790 = vpop.f32.mrb[0].mxu0
      %791 = vmatprep.mubr.f32.mxu0 0.0
      %792 = vmatmul.mubr.f32.gmra.mrb[0].mxu0 %v662
      %v793 = vpop.f32.mrb[0].mxu0
      %v794 = vadd.f32 %v631, %v793
      %v795 = vpop.f32.mrb[0].mxu0
      %796 = vmatprep.mubr.f32.mxu0 0.0
      %797 = vmatmul.mubr.f32.gmra.mrb[0].mxu0 %v665
      %v798 = vpop.f32.mrb[0].mxu0
      %v799 = vadd.f32 %v631, %v798
      %v800 = vpop.f32.mrb[0].mxu0
      %801 = vmatprep.mubr.f32.mxu0 0.0
      %802 = vmatmul.mubr.f32.gmra.mrb[0].mxu0 %v668
      %v803 = vpop.f32.mrb[0].mxu0
      %v804 = vadd.f32 %v631, %v803
      %v805 = vpop.f32.mrb[0].mxu0
      %806 = vmatprep.mubr.f32.mxu0 0.0
      %807 = vmatmul.mubr.f32.gmra.mrb[0].mxu0 %v671
      %v808 = vpop.f32.mrb[0].mxu0
      %v809 = vadd.f32 %v631, %v808
      %v810 = vpop.f32.mrb[0].mxu0
      %811 = vmatprep.mubr.f32.mxu0 0.0
      %812 = vmatmul.mubr.f32.gmra.mrb[0].mxu0 %v674
      %v813 = vpop.f32.mrb[0].mxu0
      %v814 = vadd.f32 %v631, %v813
      %v815 = vpop.f32.mrb[0].mxu0
      %816 = vmatprep.mubr.f32.mxu0 0.0
      %817 = vmatmul.mubr.f32.gmra.mrb[0].mxu0 %v677
      %v818 = vpop.f32.mrb[0].mxu0
      %v819 = vadd.f32 %v631, %v818
      %v820 = vpop.f32.mrb[0].mxu0
      %821 = vmatprep.mubr.f32.mxu0 0.0
      %822 = vmatmul.mubr.f32.gmra.mrb[0].mxu0 %v680
      %v823 = vpop.f32.mrb[0].mxu0
      %v824 = vadd.f32 %v631, %v823
      %v825 = vpop.f32.mrb[0].mxu0
      %826 = vdwg.mxu0
      %vm827 = vcmp.ge.f32.partialorder %v749, 0.0
      %vm828 = vcmp.ge.f32.partialorder %v754, 0.0
      %vm829 = vcmp.ge.f32.partialorder %v759, 0.0
      %vm830 = vcmp.ge.f32.partialorder %v764, 0.0
      %vm831 = vcmp.ge.f32.partialorder %v769, 0.0
      %vm832 = vcmp.ge.f32.partialorder %v774, 0.0
      %vm833 = vcmp.ge.f32.partialorder %v779, 0.0
      %vm834 = vcmp.ge.f32.partialorder %v784, 0.0
      %vm835 = vcmp.ge.f32.partialorder %v789, 0.0
      %vm836 = vcmp.ge.f32.partialorder %v794, 0.0
      %vm837 = vcmp.ge.f32.partialorder %v799, 0.0
      %vm838 = vcmp.ge.f32.partialorder %v804, 0.0
      %vm839 = vcmp.ge.f32.partialorder %v809, 0.0
      %vm840 = vcmp.ge.f32.partialorder %v814, 0.0
      %vm841 = vcmp.ge.f32.partialorder %v819, 0.0
      %vm842 = vcmp.ge.f32.partialorder %v824, 0.0
      %v843 = vmul.f32 %v749, 0.01
      %v844 = vmul.f32 %v754, 0.01
      %v845 = vmul.f32 %v759, 0.01
      %v846 = vmul.f32 %v764, 0.01
      %v847 = vmul.f32 %v769, 0.01
      %v848 = vmul.f32 %v774, 0.01
      %v849 = vmul.f32 %v779, 0.01
      %v850 = vmul.f32 %v784, 0.01
      %v851 = vmul.f32 %v789, 0.01
      %v852 = vmul.f32 %v794, 0.01
      %v853 = vmul.f32 %v799, 0.01
      %v854 = vmul.f32 %v804, 0.01
      %v855 = vmul.f32 %v809, 0.01
      %v856 = vmul.f32 %v814, 0.01
      %v857 = vmul.f32 %v819, 0.01
      %v858 = vmul.f32 %v824, 0.01
      %v859 = vsel %vm827, %v749, %v843
      %v860 = vsel %vm828, %v754, %v844
      %v861 = vsel %vm829, %v759, %v845
      %v862 = vsel %vm830, %v764, %v846
      %v863 = vsel %vm831, %v769, %v847
      %v864 = vsel %vm832, %v774, %v848
      %v865 = vsel %vm833, %v779, %v849
      %v866 = vsel %vm834, %v784, %v850
      %v867 = vsel %vm835, %v789, %v851
      %v868 = vsel %vm836, %v794, %v852
      %v869 = vsel %vm837, %v799, %v853
      %v870 = vsel %vm838, %v804, %v854
      %v871 = vsel %vm839, %v809, %v855
      %v872 = vsel %vm840, %v814, %v856
      %v873 = vsel %vm841, %v819, %v857
      %v874 = vsel %vm842, %v824, %v858
      %v875 = vld [vmem:[%s5] sm:$0x1]
      %v876 = vld [vmem:[#allocation2] sm:$0x1]
      %878 = vset.pattern.permute.xlu0 0
      %879 = vperm.xlu0 %878, %v876
      %v880 = vpop.permute.xlu0 %879
      %v882 = vlaneseq
      %v883 = vshrl.u32 %v882, 7
      %v884 = vsub.s32 0, %v883
      %v885 = vrot.slane %v880, %v884
      %vm886 = vcmask 261120
      %v888 = vsel %vm886, %v875, 0
      %v891 = vsel %vm886, %v859, 0
      %v894 = vsel %vm886, %v860, 0
      %v897 = vsel %vm886, %v861, 0
      %v900 = vsel %vm886, %v862, 0
      %v903 = vsel %vm886, %v863, 0
      %v906 = vsel %vm886, %v864, 0
      %v909 = vsel %vm886, %v865, 0
      %v912 = vsel %vm886, %v866, 0
      %v915 = vsel %vm886, %v867, 0
      %v918 = vsel %vm886, %v868, 0
      %v921 = vsel %vm886, %v869, 0
      %v924 = vsel %vm886, %v870, 0
      %v927 = vsel %vm886, %v871, 0
      %v930 = vsel %vm886, %v872, 0
      %v933 = vsel %vm886, %v873, 0
      %v936 = vsel %vm886, %v874, 0
      %938 = vmatprep.subr.mxu0 0.0
      %939 = vmatpush1.xpose.msra.mxu0 %v891
      %940 = vmatprep.subr.mxu0 0.0
      %941 = vmatpush1.xpose.msra.mxu0 %v894
      %942 = vmatprep.subr.mxu0 0.0
      %943 = vmatpush1.xpose.msra.mxu0 %v897
      %944 = vmatprep.subr.mxu0 0.0
      %945 = vmatpush1.xpose.msra.mxu0 %v900
      %946 = vmatprep.subr.mxu0 0.0
      %947 = vmatpush1.xpose.msra.mxu0 %v903
      %948 = vmatprep.subr.mxu0 0.0
      %949 = vmatpush1.xpose.msra.mxu0 %v906
      %950 = vmatprep.subr.mxu0 0.0
      %951 = vmatpush1.xpose.msra.mxu0 %v909
      %952 = vmatprep.subr.mxu0 0.0
      %953 = vmatpush1.xpose.msra.mxu0 %v912
      %954 = vmatprep.subr.mxu0 0.0
      %955 = vmatpush1.xpose.msra.mxu0 %v915
      %956 = vmatprep.subr.mxu0 0.0
      %957 = vmatpush1.xpose.msra.mxu0 %v918
      %958 = vmatprep.subr.mxu0 0.0
      %959 = vmatpush1.xpose.msra.mxu0 %v921
      %960 = vmatprep.subr.mxu0 0.0
      %961 = vmatpush1.xpose.msra.mxu0 %v924
      %962 = vmatprep.subr.mxu0 0.0
      %963 = vmatpush1.xpose.msra.mxu0 %v927
      %964 = vmatprep.subr.mxu0 0.0
      %965 = vmatpush1.xpose.msra.mxu0 %v930
      %966 = vmatprep.subr.mxu0 0.0
      %967 = vmatpush1.xpose.msra.mxu0 %v933
      %968 = vmatprep.subr.mxu0 0.0
      %969 = vmatpush1.xpose.msra.mxu0 %v936
      %970 = vmatprep.subr.mxu0 0.0
      %971 = vmatpush1.xpose.msra.mxu0 0.0
      %972 = vmatprep.subr.mxu0 0.0
      %973 = vmatpush1.xpose.msra.mxu0 0.0
      %974 = vmatprep.subr.mxu0 0.0
      %975 = vmatpush1.xpose.msra.mxu0 0.0
      %976 = vmatprep.subr.mxu0 0.0
      %977 = vmatpush1.xpose.msra.mxu0 0.0
      %978 = vmatprep.subr.mxu0 0.0
      %979 = vmatpush1.xpose.msra.mxu0 0.0
      %980 = vmatprep.subr.mxu0 0.0
      %981 = vmatpush1.xpose.msra.mxu0 0.0
      %982 = vmatprep.subr.mxu0 0.0
      %983 = vmatpush1.xpose.msra.mxu0 0.0
      %984 = vmatprep.subr.mxu0 0.0
      %985 = vmatpush1.xpose.msra.mxu0 0.0
      %986 = vmatprep.subr.mxu0 0.0
      %987 = vmatpush1.xpose.msra.mxu0 0.0
      %988 = vmatprep.subr.mxu0 0.0
      %989 = vmatpush1.xpose.msra.mxu0 0.0
      %990 = vmatprep.subr.mxu0 0.0
      %991 = vmatpush1.xpose.msra.mxu0 0.0
      %992 = vmatprep.subr.mxu0 0.0
      %993 = vmatpush1.xpose.msra.mxu0 0.0
      %994 = vmatprep.subr.mxu0 0.0
      %995 = vmatpush1.xpose.msra.mxu0 0.0
      %996 = vmatprep.subr.mxu0 0.0
      %997 = vmatpush1.xpose.msra.mxu0 0.0
      %998 = vmatprep.subr.mxu0 0.0
      %999 = vmatpush1.xpose.msra.mxu0 0.0
      %1000 = vmatprep.subr.mxu0 0.0
      %1001 = vmatpush1.xpose.msra.mxu0 0.0
      %1002 = vmatprep.mubr.f32.mxu0 0.0
      %1003 = vmatmul.mubr.f32.gmra.mrb[0].mxu0 %v888
      %v1004 = vpop.f32.mrb[0].mxu0
      %v1005 = vadd.f32 %v885, %v1004
      %v1006 = vpop.f32.mrb[0].mxu0
      %1007 = vdwg.mxu0
      %v1008 = vxor.u32 %v1005, 2147483648
      %v1009 = vmul.f32 %v1008, 1.442695
      %v1010 = vpow.pop %v1009
      %v1011 = vadd.f32 %v1010, 1.0
      %v1012 = vrcp.pop %v1011
      %v1013 = vmul.f32 1.0, %v1012
      %1014 = vst [vmem:[%s315] sm:$0x1] %v1013
      %p1015 = scmp.lt.s32.totalorder %s24, 1
      %s1016 = scalar_select %p1015, %s24, 1
      %p1017 = scmp.lt.s32.totalorder %s25, 0
      %s1018 = scalar_select %p1017, %s25, 0
      %s1019 = sadd.s32 %s1018, %s1016
      %s1020 = scalar_lea.vmem %s7, %s1019
      // Predicated region
      $region49: #{pmask_net_forward.3} parent=47 // pred_check
        %p1021 = pneg %p206
      $region50: #{pmask_net_forward.3} parent=47 // pred_check_branch
        %1023 = sbr.rel (%p1021) target = $region52
      $region51: #{pmask_net_forward.3} parent=47 // pred_region
        _
      $region52: #{pmask_net_forward.3} parent=47 // pred_fallthru
        _
    $region48: #{pmask_net_forward.3} parent=5 // pred_fallthru
      _
    %p1024 = scmp.le.s32.totalorder 2, %s15
    // Predicated region
    $region53: #{pmask_net_forward.3} parent=5 // pred_check
      %p1025 = pneg %p1024
    $region54: #{pmask_net_forward.3} parent=5 // pred_check_branch
      %1027 = sbr.rel (%p1025) target = $region56
    $region55: #{pmask_net_forward.3} parent=5 // pred_region
      %s1028 = ssub.s32 %s15, 2
      // Predicated region
      $region57: #{pmask_net_forward.3} parent=55 // pred_check
        %p1029 = pneg %p212
      $region58: #{pmask_net_forward.3} parent=55 // pred_check_branch
        %1031 = sbr.rel (%p1029) target = $region60
      $region59: #{pmask_net_forward.3} parent=55 // pred_region
        %p1032 = scmp.lt.s32.totalorder %s26, 1
        %s1033 = scalar_select %p1032, %s26, 1
        %p1034 = scmp.lt.s32.totalorder %s27, 0
        %s1035 = scalar_select %p1034, %s27, 0
        %s1036 = sadd.s32 %s1035, %s1033
        %s1037 = scalar_lea.vmem %s7, %s1036
      $region60: #{pmask_net_forward.3} parent=55 // pred_fallthru
        _
    $region56: #{pmask_net_forward.3} parent=5 // pred_fallthru
      _
  $region6: #{pmask_net_forward.3} parent=0 // loop_footer
    %s19 = sadd.s32 1, %s15
  $region7: #{pmask_net_forward.3} parent=0 // loop_footer_branch
    %14 = sbr.rel target = $region3
  $region8: #{pmask_net_forward.3} parent=0 // loop_exit
    _

</llo_original>
